<compile_context>
chip_gen: v7x
topology: tpu7x:2x2x1
jax: 0.10.0
libtpu: 0.0.40
codegen_flags: <defaults>
</compile_context>

<pallas_src>
import functools

import jax
import jax.numpy as jnp
from jax.experimental import pallas as pl
from jax.experimental.pallas import tpu as pltpu


def _round_up(v, m):
    return (v + m - 1) // m * m


# ----------------------------- Pallas kernel --------------------------------
def _conv3x3(x, masks_ref, w_ref, b_ref, patch_ref, shifts, relu):
    """One 3x3 'same' conv in flattened-spatial layout.

    x:         (Cin, L) f32 activations; spatial (+ batch tile) on the lane axis.
    masks_ref: (9, Cmax, L) f32 border-validity masks, one plane per tap.
    w_ref:     (Cout, 9*Cin) bf16 tap-major flattened weights.
    b_ref:     (Cout, 1) f32 bias.
    patch_ref: (9*Cmax, L) bf16 VMEM scratch holding the im2col patches.
    """
    ci = x.shape[0]
    for t, s in enumerate(shifts):
        rolled = pltpu.roll(x, shift=s, axis=1) if s else x
        # Centre tap (t == 4) is always in-bounds -> no mask multiply needed.
        val = rolled if t == 4 else rolled * masks_ref[t, :ci, :]
        patch_ref[t * ci:(t + 1) * ci, :] = val.astype(patch_ref.dtype)
    acc = jax.lax.dot_general(                      # one MXU matmul, K = 9*Cin
        w_ref[...], patch_ref[0:9 * ci, :],
        dimension_numbers=(((1,), (0,)), ((), ())),
        preferred_element_type=jnp.float32)
    acc = acc + b_ref[...]                          # bias broadcast over lanes
    return jnp.maximum(acc, 0.0) if relu else acc


def _fused_net_kernel(x_ref, masks_ref, w1, b1, w2, b2, w3, b3, w4, b4,
                      o_ref, patch_ref, *, shifts):
    """Whole encoder->decoder stack for one batch tile; everything stays in VMEM.

    x_ref: (Cin_pad, L)  o_ref: (Cout_pad, L)   with L = B_TILE * H * W.
    """
    x = x_ref[...].astype(jnp.float32)
    h = _conv3x3(x, masks_ref, w1, b1, patch_ref, shifts, relu=True)   # enc conv1
    h = _conv3x3(h, masks_ref, w2, b2, patch_ref, shifts, relu=True)   # enc conv2
    h = _conv3x3(h, masks_ref, w3, b3, patch_ref, shifts, relu=True)   # dec conv1
    y = _conv3x3(h, masks_ref, w4, b4, patch_ref, shifts, relu=False)  # dec conv2
    o_ref[...] = y.astype(o_ref.dtype)


# ------------------------------- forward ------------------------------------
@functools.partial(jax.jit, static_argnames=("b_tile",))
def combinatorial_forward(x_nchw, params, *, b_tile=None):
    """Forward of CombinatorialTrainer: encoder -> decoder reconstruction head."""
    N, cin, H, W = x_nchw.shape
    HW = H * W

    # ---- pad channels to multiples of 8, flatten weights to (Cout, 9*Cin) ----
    flat_w, flat_b, c_pads = [], [], []
    for (w, b) in params:
        kh, kw, ci, co = w.shape
        ci_p, co_p = _round_up(ci, 8), _round_up(co, 8)
        w_p = jnp.zeros((kh, kw, ci_p, co_p), jnp.float32).at[:, :, :ci, :co].set(w)
        b_p = jnp.zeros((co_p,), jnp.float32).at[:co].set(b)
        # tap-major-then-channel flattening, matching the in-kernel tap order
        flat_w.append(jnp.transpose(w_p, (3, 0, 1, 2))
                      .reshape(co_p, kh * kw * ci_p).astype(jnp.bfloat16))
        flat_b.append(b_p.reshape(co_p, 1))
        c_pads.append((ci_p, co_p))
    for a, b_ in zip(c_pads[:-1], c_pads[1:]):
        assert a[1] == b_[0], "layer channel chain mismatch"
    cin_p = c_pads[0][0]
    co_last_p = c_pads[-1][1]
    nclass = params[-1][0].shape[-1]
    c_max = max(p[0] for p in c_pads)            # widest input-channel count

    # ---- batch tiling: B_TILE images per grid step on the lane axis ----
    if b_tile is None:
        b_tile = 8 if N >= 16 else max(1, N // 2)   # keep grid >= 2 when possible
    n_pad = _round_up(N, b_tile)
    num_tiles = n_pad // b_tile
    L = b_tile * HW

    # ---- input: NCHW -> (Cin_pad, n_pad*HW); keep source dtype (cast in-kernel) ----
    x = jnp.transpose(x_nchw.reshape(N, cin, HW), (1, 0, 2))        # (Cin, N, HW)
    x = jnp.pad(x, ((0, cin_p - cin), (0, n_pad - N), (0, 0)))
    x = x.reshape(cin_p, n_pad * HW)

    # ---- precomputed halo masks (tiled per image) + static roll amounts ----
    pos = jnp.arange(HW, dtype=jnp.int32)
    yy, xx = pos // W, pos % W
    shifts, mrows = [], []
    for dy in (-1, 0, 1):
        for dx in (-1, 0, 1):
            valid = ((yy + dy >= 0) & (yy + dy < H) &
                     (xx + dx >= 0) & (xx + dx < W))
            mrows.append(valid)
            shifts.append((-(dy * W + dx)) % L)
    masks = jnp.stack(mrows).astype(jnp.float32)                    # (9, HW)
    masks = jnp.tile(masks, (1, b_tile))                            # (9, L)
    masks = jnp.broadcast_to(masks[:, None, :], (9, c_max, L))      # (9, Cmax, L)

    w1, w2, w3, w4 = flat_w
    b1, b2, b3, b4 = flat_b
    kernel = functools.partial(_fused_net_kernel, shifts=tuple(shifts))
    const2 = lambda shape: pl.BlockSpec(shape, lambda n: (0, 0))

    out = pl.pallas_call(
        kernel,
        out_shape=jax.ShapeDtypeStruct((co_last_p, n_pad * HW), jnp.float32),
        grid_spec=pltpu.PrefetchScalarGridSpec(
            num_scalar_prefetch=0,
            grid=(num_tiles,),
            in_specs=[
                pl.BlockSpec((cin_p, L), lambda n: (0, n)),
                pl.BlockSpec((9, c_max, L), lambda n: (0, 0, 0)),
                const2(w1.shape), const2(b1.shape),
                const2(w2.shape), const2(b2.shape),
                const2(w3.shape), const2(b3.shape),
                const2(w4.shape), const2(b4.shape),
            ],
            out_specs=pl.BlockSpec((co_last_p, L), lambda n: (0, n)),
            scratch_shapes=[pltpu.VMEM((9 * c_max, L), jnp.bfloat16)],
        ),
        compiler_params=pltpu.CompilerParams(
            dimension_semantics=("parallel",)),
    )(x, masks, w1, b1, w2, b2, w3, b3, w4, b4)

    out = out.reshape(co_last_p, n_pad, HW)[:nclass, :N]            # drop padding
    return jnp.transpose(out, (1, 0, 2)).reshape(N, nclass, H, W)


# --------------------------- parameter construction -------------------------
def _xavier_uniform(key, shape):
    # shape = (kh, kw, cin, cout); same fan computation as nn.init.xavier_uniform_
    kh, kw, cin, cout = shape
    limit = (6.0 / (kh * kw * cin + kh * kw * cout)) ** 0.5
    return jax.random.uniform(key, shape, jnp.float32, -limit, limit)


def init_params(key, in_ch, enc_mid, enc_out, dec_mid, nclass):
    keys = jax.random.split(key, 4)
    specs = [(in_ch, enc_mid), (enc_mid, enc_out), (enc_out, dec_mid), (dec_mid, nclass)]
    params = []
    for k, (ci, co) in zip(keys, specs):
        w = _xavier_uniform(k, (3, 3, ci, co))
        b = jnp.full((co,), 0.1, jnp.float32)   # nn.init.constant_(bias, 0.1)
        params.append((w, b))
    return params


# ------------------------------ JAX reference --------------------------------
def _reference_forward(x, params):
    h = x.astype(jnp.float32)
    for i, (w, b) in enumerate(params):
        h = jax.lax.conv_general_dilated(
            h, w, window_strides=(1, 1), padding="SAME",
            dimension_numbers=("NCHW", "HWIO", "NCHW"),
            precision=jax.lax.Precision.HIGHEST)
        h = h + b.reshape(1, -1, 1, 1)
        if i < len(params) - 1:
            h = jnp.maximum(h, 0.0)
    return h


if __name__ == "__main__":
    combinatorial_args = {
        "encoder": {"in_channels": 4, "mid_channels": 8, "out_channels": 16},
        "ordinal": {"mid_channels": 8, "out_channels": 4},
        "decoder": {"mid_channels": 8, "out_channels": 4},
        "nclass": 4,
    }
    N, C, H, W = 4, combinatorial_args["encoder"]["in_channels"], 16, 16

    key = jax.random.PRNGKey(0)
    k_x, k_p = jax.random.split(key)
    x = jax.random.normal(k_x, (N, C, H, W), jnp.float32)

    params = init_params(
        k_p,
        in_ch=C,
        enc_mid=combinatorial_args["encoder"]["mid_channels"],
        enc_out=combinatorial_args["encoder"]["out_channels"],
        dec_mid=combinatorial_args["decoder"]["mid_channels"],
        nclass=combinatorial_args["nclass"],
    )

    y = combinatorial_forward(x, params)
    jax.block_until_ready(y)
    assert y.shape == (N, combinatorial_args["nclass"], H, W), y.shape

    y_ref = _reference_forward(x, params)
    err = float(jnp.max(jnp.abs(y - y_ref)))
    assert err < 1e-1, f"max abs err vs reference conv: {err}"
    print("KERNEL_OK")
</pallas_src>

<mosaic_0001>
module attributes {stable_mosaic.version = 11 : i64} {
  func.func @_fused_net_kernel(%arg0: i32, %arg1: memref<8x512xf32, #tpu.memory_space<vmem>>, %arg2: memref<9x16x512xf32, #tpu.memory_space<vmem>>, %arg3: memref<8x72xbf16, #tpu.memory_space<vmem>>, %arg4: memref<8x1xf32, #tpu.memory_space<vmem>>, %arg5: memref<16x72xbf16, #tpu.memory_space<vmem>>, %arg6: memref<16x1xf32, #tpu.memory_space<vmem>>, %arg7: memref<8x144xbf16, #tpu.memory_space<vmem>>, %arg8: memref<8x1xf32, #tpu.memory_space<vmem>>, %arg9: memref<8x72xbf16, #tpu.memory_space<vmem>>, %arg10: memref<8x1xf32, #tpu.memory_space<vmem>>, %arg11: memref<8x512xf32, #tpu.memory_space<vmem>>, %arg12: memref<144x512xbf16, #tpu.memory_space<vmem>>) attributes {dimension_semantics = [#tpu.dimension_semantics<parallel>], iteration_bounds = array<i64: 2>, scalar_prefetch = 0 : i64, scratch_operands = 1 : i64, tpu.core_type = #tpu.core_type<tc>, window_params = [{transform_indices = @transform_0, window_bounds = array<i64: 8, 512>}, {pipeline_mode = #tpu.pipeline_mode<synchronous>, transform_indices = @transform_1, window_bounds = array<i64: 9, 16, 512>}, {pipeline_mode = #tpu.pipeline_mode<synchronous>, transform_indices = @transform_2, window_bounds = array<i64: 8, 72>}, {pipeline_mode = #tpu.pipeline_mode<synchronous>, transform_indices = @transform_3, window_bounds = array<i64: 8, 1>}, {pipeline_mode = #tpu.pipeline_mode<synchronous>, transform_indices = @transform_4, window_bounds = array<i64: 16, 72>}, {pipeline_mode = #tpu.pipeline_mode<synchronous>, transform_indices = @transform_5, window_bounds = array<i64: 16, 1>}, {pipeline_mode = #tpu.pipeline_mode<synchronous>, transform_indices = @transform_6, window_bounds = array<i64: 8, 144>}, {pipeline_mode = #tpu.pipeline_mode<synchronous>, transform_indices = @transform_7, window_bounds = array<i64: 8, 1>}, {pipeline_mode = #tpu.pipeline_mode<synchronous>, transform_indices = @transform_8, window_bounds = array<i64: 8, 72>}, {pipeline_mode = #tpu.pipeline_mode<synchronous>, transform_indices = @transform_9, window_bounds = array<i64: 8, 1>}, {transform_indices = @transform_10, window_bounds = array<i64: 8, 512>}]} {
    %c0 = arith.constant 0 : index
    %c0_0 = arith.constant 0 : index
    %0 = vector.load %arg1[%c0, %c0_0] : memref<8x512xf32, #tpu.memory_space<vmem>>, vector<8x512xf32>
    %c17_i32 = arith.constant 17 : i32
    %1 = tpu.dynamic_rotate %0 by %c17_i32 dim 1 : vector<8x512xf32>, i32 -> vector<8x512xf32>
    %c0_1 = arith.constant 0 : index
    %c0_2 = arith.constant 0 : index
    %c0_3 = arith.constant 0 : index
    %2 = vector.load %arg2[%c0_1, %c0_2, %c0_3] : memref<9x16x512xf32, #tpu.memory_space<vmem>>, vector<1x8x512xf32>
    %3 = vector.shape_cast %2 : vector<1x8x512xf32> to vector<8x512xf32>
    %4 = arith.mulf %1, %3 : vector<8x512xf32>
    %5 = arith.truncf %4 : vector<8x512xf32> to vector<8x512xbf16>
    %c0_4 = arith.constant 0 : index
    %c0_5 = arith.constant 0 : index
    %6 = vector.load %arg12[%c0_4, %c0_5] : memref<144x512xbf16, #tpu.memory_space<vmem>>, vector<8x512xbf16>
    tpu.vector_store %arg12[%c0_4, %c0_5], %5 {strides = array<i32>} : memref<144x512xbf16, #tpu.memory_space<vmem>>, vector<8x512xbf16>,
    %c16_i32 = arith.constant 16 : i32
    %7 = tpu.dynamic_rotate %0 by %c16_i32 dim 1 : vector<8x512xf32>, i32 -> vector<8x512xf32>
    %c1 = arith.constant 1 : index
    %c0_6 = arith.constant 0 : index
    %c0_7 = arith.constant 0 : index
    %8 = vector.load %arg2[%c1, %c0_6, %c0_7] : memref<9x16x512xf32, #tpu.memory_space<vmem>>, vector<1x8x512xf32>
    %9 = vector.shape_cast %8 : vector<1x8x512xf32> to vector<8x512xf32>
    %10 = arith.mulf %7, %9 : vector<8x512xf32>
    %11 = arith.truncf %10 : vector<8x512xf32> to vector<8x512xbf16>
    %c8 = arith.constant 8 : index
    %c0_8 = arith.constant 0 : index
    %12 = vector.load %arg12[%c8, %c0_8] : memref<144x512xbf16, #tpu.memory_space<vmem>>, vector<8x512xbf16>
    tpu.vector_store %arg12[%c8, %c0_8], %11 {strides = array<i32>} : memref<144x512xbf16, #tpu.memory_space<vmem>>, vector<8x512xbf16>,
    %c15_i32 = arith.constant 15 : i32
    %13 = tpu.dynamic_rotate %0 by %c15_i32 dim 1 : vector<8x512xf32>, i32 -> vector<8x512xf32>
    %c2 = arith.constant 2 : index
    %c0_9 = arith.constant 0 : index
    %c0_10 = arith.constant 0 : index
    %14 = vector.load %arg2[%c2, %c0_9, %c0_10] : memref<9x16x512xf32, #tpu.memory_space<vmem>>, vector<1x8x512xf32>
    %15 = vector.shape_cast %14 : vector<1x8x512xf32> to vector<8x512xf32>
    %16 = arith.mulf %13, %15 : vector<8x512xf32>
    %17 = arith.truncf %16 : vector<8x512xf32> to vector<8x512xbf16>
    %c16 = arith.constant 16 : index
    %c0_11 = arith.constant 0 : index
    %18 = vector.load %arg12[%c16, %c0_11] : memref<144x512xbf16, #tpu.memory_space<vmem>>, vector<8x512xbf16>
    tpu.vector_store %arg12[%c16, %c0_11], %17 {strides = array<i32>} : memref<144x512xbf16, #tpu.memory_space<vmem>>, vector<8x512xbf16>,
    %c1_i32 = arith.constant 1 : i32
    %19 = tpu.dynamic_rotate %0 by %c1_i32 dim 1 : vector<8x512xf32>, i32 -> vector<8x512xf32>
    %c3 = arith.constant 3 : index
    %c0_12 = arith.constant 0 : index
    %c0_13 = arith.constant 0 : index
    %20 = vector.load %arg2[%c3, %c0_12, %c0_13] : memref<9x16x512xf32, #tpu.memory_space<vmem>>, vector<1x8x512xf32>
    %21 = vector.shape_cast %20 : vector<1x8x512xf32> to vector<8x512xf32>
    %22 = arith.mulf %19, %21 : vector<8x512xf32>
    %23 = arith.truncf %22 : vector<8x512xf32> to vector<8x512xbf16>
    %c24 = arith.constant 24 : index
    %c0_14 = arith.constant 0 : index
    %24 = vector.load %arg12[%c24, %c0_14] : memref<144x512xbf16, #tpu.memory_space<vmem>>, vector<8x512xbf16>
    tpu.vector_store %arg12[%c24, %c0_14], %23 {strides = array<i32>} : memref<144x512xbf16, #tpu.memory_space<vmem>>, vector<8x512xbf16>,
    %25 = arith.truncf %0 : vector<8x512xf32> to vector<8x512xbf16>
    %c32 = arith.constant 32 : index
    %c0_15 = arith.constant 0 : index
    %26 = vector.load %arg12[%c32, %c0_15] : memref<144x512xbf16, #tpu.memory_space<vmem>>, vector<8x512xbf16>
    tpu.vector_store %arg12[%c32, %c0_15], %25 {strides = array<i32>} : memref<144x512xbf16, #tpu.memory_space<vmem>>, vector<8x512xbf16>,
    %c511_i32 = arith.constant 511 : i32
    %27 = tpu.dynamic_rotate %0 by %c511_i32 dim 1 : vector<8x512xf32>, i32 -> vector<8x512xf32>
    %c5 = arith.constant 5 : index
    %c0_16 = arith.constant 0 : index
    %c0_17 = arith.constant 0 : index
    %28 = vector.load %arg2[%c5, %c0_16, %c0_17] : memref<9x16x512xf32, #tpu.memory_space<vmem>>, vector<1x8x512xf32>
    %29 = vector.shape_cast %28 : vector<1x8x512xf32> to vector<8x512xf32>
    %30 = arith.mulf %27, %29 : vector<8x512xf32>
    %31 = arith.truncf %30 : vector<8x512xf32> to vector<8x512xbf16>
    %c40 = arith.constant 40 : index
    %c0_18 = arith.constant 0 : index
    %32 = vector.load %arg12[%c40, %c0_18] : memref<144x512xbf16, #tpu.memory_space<vmem>>, vector<8x512xbf16>
    tpu.vector_store %arg12[%c40, %c0_18], %31 {strides = array<i32>} : memref<144x512xbf16, #tpu.memory_space<vmem>>, vector<8x512xbf16>,
    %c497_i32 = arith.constant 497 : i32
    %33 = tpu.dynamic_rotate %0 by %c497_i32 dim 1 : vector<8x512xf32>, i32 -> vector<8x512xf32>
    %c6 = arith.constant 6 : index
    %c0_19 = arith.constant 0 : index
    %c0_20 = arith.constant 0 : index
    %34 = vector.load %arg2[%c6, %c0_19, %c0_20] : memref<9x16x512xf32, #tpu.memory_space<vmem>>, vector<1x8x512xf32>
    %35 = vector.shape_cast %34 : vector<1x8x512xf32> to vector<8x512xf32>
    %36 = arith.mulf %33, %35 : vector<8x512xf32>
    %37 = arith.truncf %36 : vector<8x512xf32> to vector<8x512xbf16>
    %c48 = arith.constant 48 : index
    %c0_21 = arith.constant 0 : index
    %38 = vector.load %arg12[%c48, %c0_21] : memref<144x512xbf16, #tpu.memory_space<vmem>>, vector<8x512xbf16>
    tpu.vector_store %arg12[%c48, %c0_21], %37 {strides = array<i32>} : memref<144x512xbf16, #tpu.memory_space<vmem>>, vector<8x512xbf16>,
    %c496_i32 = arith.constant 496 : i32
    %39 = tpu.dynamic_rotate %0 by %c496_i32 dim 1 : vector<8x512xf32>, i32 -> vector<8x512xf32>
    %c7 = arith.constant 7 : index
    %c0_22 = arith.constant 0 : index
    %c0_23 = arith.constant 0 : index
    %40 = vector.load %arg2[%c7, %c0_22, %c0_23] : memref<9x16x512xf32, #tpu.memory_space<vmem>>, vector<1x8x512xf32>
    %41 = vector.shape_cast %40 : vector<1x8x512xf32> to vector<8x512xf32>
    %42 = arith.mulf %39, %41 : vector<8x512xf32>
    %43 = arith.truncf %42 : vector<8x512xf32> to vector<8x512xbf16>
    %c56 = arith.constant 56 : index
    %c0_24 = arith.constant 0 : index
    %44 = vector.load %arg12[%c56, %c0_24] : memref<144x512xbf16, #tpu.memory_space<vmem>>, vector<8x512xbf16>
    tpu.vector_store %arg12[%c56, %c0_24], %43 {strides = array<i32>} : memref<144x512xbf16, #tpu.memory_space<vmem>>, vector<8x512xbf16>,
    %c495_i32 = arith.constant 495 : i32
    %45 = tpu.dynamic_rotate %0 by %c495_i32 dim 1 : vector<8x512xf32>, i32 -> vector<8x512xf32>
    %c8_25 = arith.constant 8 : index
    %c0_26 = arith.constant 0 : index
    %c0_27 = arith.constant 0 : index
    %46 = vector.load %arg2[%c8_25, %c0_26, %c0_27] : memref<9x16x512xf32, #tpu.memory_space<vmem>>, vector<1x8x512xf32>
    %47 = vector.shape_cast %46 : vector<1x8x512xf32> to vector<8x512xf32>
    %48 = arith.mulf %45, %47 : vector<8x512xf32>
    %49 = arith.truncf %48 : vector<8x512xf32> to vector<8x512xbf16>
    %c64 = arith.constant 64 : index
    %c0_28 = arith.constant 0 : index
    %50 = vector.load %arg12[%c64, %c0_28] : memref<144x512xbf16, #tpu.memory_space<vmem>>, vector<8x512xbf16>
    tpu.vector_store %arg12[%c64, %c0_28], %49 {strides = array<i32>} : memref<144x512xbf16, #tpu.memory_space<vmem>>, vector<8x512xbf16>,
    %c0_29 = arith.constant 0 : index
    %c0_30 = arith.constant 0 : index
    %51 = vector.load %arg3[%c0_29, %c0_30] : memref<8x72xbf16, #tpu.memory_space<vmem>>, vector<8x72xbf16>
    %c0_31 = arith.constant 0 : index
    %c0_32 = arith.constant 0 : index
    %52 = vector.load %arg12[%c0_31, %c0_32] : memref<144x512xbf16, #tpu.memory_space<vmem>>, vector<72x512xbf16>
    %cst = arith.constant dense<0.000000e+00> : vector<8x512xf32>
    %53 = tpu.matmul %51, %52, %cst {dimension_numbers = #tpu.dot_dimension_numbers<[1], [0], [0], [1], [0, 0, 1, 1], [], []>} : vector<8x72xbf16>, vector<72x512xbf16>, vector<8x512xf32> -> vector<8x512xf32>
    %c0_33 = arith.constant 0 : index
    %c0_34 = arith.constant 0 : index
    %54 = vector.load %arg4[%c0_33, %c0_34] : memref<8x1xf32, #tpu.memory_space<vmem>>, vector<8x1xf32>
    %55 = vector.broadcast %54 : vector<8x1xf32> to vector<8x512xf32>
    %56 = arith.addf %53, %55 : vector<8x512xf32>
    %cst_35 = arith.constant 0.000000e+00 : f32
    %57 = vector.broadcast %cst_35 : f32 to vector<8x512xf32>
    %58 = arith.maximumf %56, %57 : vector<8x512xf32>
    %c17_i32_36 = arith.constant 17 : i32
    %59 = tpu.dynamic_rotate %58 by %c17_i32_36 dim 1 : vector<8x512xf32>, i32 -> vector<8x512xf32>
    %c0_37 = arith.constant 0 : index
    %c0_38 = arith.constant 0 : index
    %c0_39 = arith.constant 0 : index
    %60 = vector.load %arg2[%c0_37, %c0_38, %c0_39] : memref<9x16x512xf32, #tpu.memory_space<vmem>>, vector<1x8x512xf32>
    %61 = vector.shape_cast %60 : vector<1x8x512xf32> to vector<8x512xf32>
    %62 = arith.mulf %59, %61 : vector<8x512xf32>
    %63 = arith.truncf %62 : vector<8x512xf32> to vector<8x512xbf16>
    %c0_40 = arith.constant 0 : index
    %c0_41 = arith.constant 0 : index
    %64 = vector.load %arg12[%c0_40, %c0_41] : memref<144x512xbf16, #tpu.memory_space<vmem>>, vector<8x512xbf16>
    tpu.vector_store %arg12[%c0_40, %c0_41], %63 {strides = array<i32>} : memref<144x512xbf16, #tpu.memory_space<vmem>>, vector<8x512xbf16>,
    %c16_i32_42 = arith.constant 16 : i32
    %65 = tpu.dynamic_rotate %58 by %c16_i32_42 dim 1 : vector<8x512xf32>, i32 -> vector<8x512xf32>
    %c1_43 = arith.constant 1 : index
    %c0_44 = arith.constant 0 : index
    %c0_45 = arith.constant 0 : index
    %66 = vector.load %arg2[%c1_43, %c0_44, %c0_45] : memref<9x16x512xf32, #tpu.memory_space<vmem>>, vector<1x8x512xf32>
    %67 = vector.shape_cast %66 : vector<1x8x512xf32> to vector<8x512xf32>
    %68 = arith.mulf %65, %67 : vector<8x512xf32>
    %69 = arith.truncf %68 : vector<8x512xf32> to vector<8x512xbf16>
    %c8_46 = arith.constant 8 : index
    %c0_47 = arith.constant 0 : index
    %70 = vector.load %arg12[%c8_46, %c0_47] : memref<144x512xbf16, #tpu.memory_space<vmem>>, vector<8x512xbf16>
    tpu.vector_store %arg12[%c8_46, %c0_47], %69 {strides = array<i32>} : memref<144x512xbf16, #tpu.memory_space<vmem>>, vector<8x512xbf16>,
    %c15_i32_48 = arith.constant 15 : i32
    %71 = tpu.dynamic_rotate %58 by %c15_i32_48 dim 1 : vector<8x512xf32>, i32 -> vector<8x512xf32>
    %c2_49 = arith.constant 2 : index
    %c0_50 = arith.constant 0 : index
    %c0_51 = arith.constant 0 : index
    %72 = vector.load %arg2[%c2_49, %c0_50, %c0_51] : memref<9x16x512xf32, #tpu.memory_space<vmem>>, vector<1x8x512xf32>
    %73 = vector.shape_cast %72 : vector<1x8x512xf32> to vector<8x512xf32>
    %74 = arith.mulf %71, %73 : vector<8x512xf32>
    %75 = arith.truncf %74 : vector<8x512xf32> to vector<8x512xbf16>
    %c16_52 = arith.constant 16 : index
    %c0_53 = arith.constant 0 : index
    %76 = vector.load %arg12[%c16_52, %c0_53] : memref<144x512xbf16, #tpu.memory_space<vmem>>, vector<8x512xbf16>
    tpu.vector_store %arg12[%c16_52, %c0_53], %75 {strides = array<i32>} : memref<144x512xbf16, #tpu.memory_space<vmem>>, vector<8x512xbf16>,
    %c1_i32_54 = arith.constant 1 : i32
    %77 = tpu.dynamic_rotate %58 by %c1_i32_54 dim 1 : vector<8x512xf32>, i32 -> vector<8x512xf32>
    %c3_55 = arith.constant 3 : index
    %c0_56 = arith.constant 0 : index
    %c0_57 = arith.constant 0 : index
    %78 = vector.load %arg2[%c3_55, %c0_56, %c0_57] : memref<9x16x512xf32, #tpu.memory_space<vmem>>, vector<1x8x512xf32>
    %79 = vector.shape_cast %78 : vector<1x8x512xf32> to vector<8x512xf32>
    %80 = arith.mulf %77, %79 : vector<8x512xf32>
    %81 = arith.truncf %80 : vector<8x512xf32> to vector<8x512xbf16>
    %c24_58 = arith.constant 24 : index
    %c0_59 = arith.constant 0 : index
    %82 = vector.load %arg12[%c24_58, %c0_59] : memref<144x512xbf16, #tpu.memory_space<vmem>>, vector<8x512xbf16>
    tpu.vector_store %arg12[%c24_58, %c0_59], %81 {strides = array<i32>} : memref<144x512xbf16, #tpu.memory_space<vmem>>, vector<8x512xbf16>,
    %83 = arith.truncf %58 : vector<8x512xf32> to vector<8x512xbf16>
    %c32_60 = arith.constant 32 : index
    %c0_61 = arith.constant 0 : index
    %84 = vector.load %arg12[%c32_60, %c0_61] : memref<144x512xbf16, #tpu.memory_space<vmem>>, vector<8x512xbf16>
    tpu.vector_store %arg12[%c32_60, %c0_61], %83 {strides = array<i32>} : memref<144x512xbf16, #tpu.memory_space<vmem>>, vector<8x512xbf16>,
    %c511_i32_62 = arith.constant 511 : i32
    %85 = tpu.dynamic_rotate %58 by %c511_i32_62 dim 1 : vector<8x512xf32>, i32 -> vector<8x512xf32>
    %c5_63 = arith.constant 5 : index
    %c0_64 = arith.constant 0 : index
    %c0_65 = arith.constant 0 : index
    %86 = vector.load %arg2[%c5_63, %c0_64, %c0_65] : memref<9x16x512xf32, #tpu.memory_space<vmem>>, vector<1x8x512xf32>
    %87 = vector.shape_cast %86 : vector<1x8x512xf32> to vector<8x512xf32>
    %88 = arith.mulf %85, %87 : vector<8x512xf32>
    %89 = arith.truncf %88 : vector<8x512xf32> to vector<8x512xbf16>
    %c40_66 = arith.constant 40 : index
    %c0_67 = arith.constant 0 : index
    %90 = vector.load %arg12[%c40_66, %c0_67] : memref<144x512xbf16, #tpu.memory_space<vmem>>, vector<8x512xbf16>
    tpu.vector_store %arg12[%c40_66, %c0_67], %89 {strides = array<i32>} : memref<144x512xbf16, #tpu.memory_space<vmem>>, vector<8x512xbf16>,
    %c497_i32_68 = arith.constant 497 : i32
    %91 = tpu.dynamic_rotate %58 by %c497_i32_68 dim 1 : vector<8x512xf32>, i32 -> vector<8x512xf32>
    %c6_69 = arith.constant 6 : index
    %c0_70 = arith.constant 0 : index
    %c0_71 = arith.constant 0 : index
    %92 = vector.load %arg2[%c6_69, %c0_70, %c0_71] : memref<9x16x512xf32, #tpu.memory_space<vmem>>, vector<1x8x512xf32>
    %93 = vector.shape_cast %92 : vector<1x8x512xf32> to vector<8x512xf32>
    %94 = arith.mulf %91, %93 : vector<8x512xf32>
    %95 = arith.truncf %94 : vector<8x512xf32> to vector<8x512xbf16>
    %c48_72 = arith.constant 48 : index
    %c0_73 = arith.constant 0 : index
    %96 = vector.load %arg12[%c48_72, %c0_73] : memref<144x512xbf16, #tpu.memory_space<vmem>>, vector<8x512xbf16>
    tpu.vector_store %arg12[%c48_72, %c0_73], %95 {strides = array<i32>} : memref<144x512xbf16, #tpu.memory_space<vmem>>, vector<8x512xbf16>,
    %c496_i32_74 = arith.constant 496 : i32
    %97 = tpu.dynamic_rotate %58 by %c496_i32_74 dim 1 : vector<8x512xf32>, i32 -> vector<8x512xf32>
    %c7_75 = arith.constant 7 : index
    %c0_76 = arith.constant 0 : index
    %c0_77 = arith.constant 0 : index
    %98 = vector.load %arg2[%c7_75, %c0_76, %c0_77] : memref<9x16x512xf32, #tpu.memory_space<vmem>>, vector<1x8x512xf32>
    %99 = vector.shape_cast %98 : vector<1x8x512xf32> to vector<8x512xf32>
    %100 = arith.mulf %97, %99 : vector<8x512xf32>
    %101 = arith.truncf %100 : vector<8x512xf32> to vector<8x512xbf16>
    %c56_78 = arith.constant 56 : index
    %c0_79 = arith.constant 0 : index
    %102 = vector.load %arg12[%c56_78, %c0_79] : memref<144x512xbf16, #tpu.memory_space<vmem>>, vector<8x512xbf16>
    tpu.vector_store %arg12[%c56_78, %c0_79], %101 {strides = array<i32>} : memref<144x512xbf16, #tpu.memory_space<vmem>>, vector<8x512xbf16>,
    %c495_i32_80 = arith.constant 495 : i32
    %103 = tpu.dynamic_rotate %58 by %c495_i32_80 dim 1 : vector<8x512xf32>, i32 -> vector<8x512xf32>
    %c8_81 = arith.constant 8 : index
    %c0_82 = arith.constant 0 : index
    %c0_83 = arith.constant 0 : index
    %104 = vector.load %arg2[%c8_81, %c0_82, %c0_83] : memref<9x16x512xf32, #tpu.memory_space<vmem>>, vector<1x8x512xf32>
    %105 = vector.shape_cast %104 : vector<1x8x512xf32> to vector<8x512xf32>
    %106 = arith.mulf %103, %105 : vector<8x512xf32>
    %107 = arith.truncf %106 : vector<8x512xf32> to vector<8x512xbf16>
    %c64_84 = arith.constant 64 : index
    %c0_85 = arith.constant 0 : index
    %108 = vector.load %arg12[%c64_84, %c0_85] : memref<144x512xbf16, #tpu.memory_space<vmem>>, vector<8x512xbf16>
    tpu.vector_store %arg12[%c64_84, %c0_85], %107 {strides = array<i32>} : memref<144x512xbf16, #tpu.memory_space<vmem>>, vector<8x512xbf16>,
    %c0_86 = arith.constant 0 : index
    %c0_87 = arith.constant 0 : index
    %109 = vector.load %arg5[%c0_86, %c0_87] : memref<16x72xbf16, #tpu.memory_space<vmem>>, vector<16x72xbf16>
    %c0_88 = arith.constant 0 : index
    %c0_89 = arith.constant 0 : index
    %110 = vector.load %arg12[%c0_88, %c0_89] : memref<144x512xbf16, #tpu.memory_space<vmem>>, vector<72x512xbf16>
    %cst_90 = arith.constant dense<0.000000e+00> : vector<16x512xf32>
    %111 = tpu.matmul %109, %110, %cst_90 {dimension_numbers = #tpu.dot_dimension_numbers<[1], [0], [0], [1], [0, 0, 1, 1], [], []>} : vector<16x72xbf16>, vector<72x512xbf16>, vector<16x512xf32> -> vector<16x512xf32>
    %c0_91 = arith.constant 0 : index
    %c0_92 = arith.constant 0 : index
    %112 = vector.load %arg6[%c0_91, %c0_92] : memref<16x1xf32, #tpu.memory_space<vmem>>, vector<16x1xf32>
    %113 = vector.broadcast %112 : vector<16x1xf32> to vector<16x512xf32>
    %114 = arith.addf %111, %113 : vector<16x512xf32>
    %cst_93 = arith.constant 0.000000e+00 : f32
    %115 = vector.broadcast %cst_93 : f32 to vector<16x512xf32>
    %116 = arith.maximumf %114, %115 : vector<16x512xf32>
    %c17_i32_94 = arith.constant 17 : i32
    %117 = tpu.dynamic_rotate %116 by %c17_i32_94 dim 1 : vector<16x512xf32>, i32 -> vector<16x512xf32>
    %c0_95 = arith.constant 0 : index
    %c0_96 = arith.constant 0 : index
    %c0_97 = arith.constant 0 : index
    %118 = vector.load %arg2[%c0_95, %c0_96, %c0_97] : memref<9x16x512xf32, #tpu.memory_space<vmem>>, vector<1x16x512xf32>
    %119 = vector.shape_cast %118 : vector<1x16x512xf32> to vector<16x512xf32>
    %120 = arith.mulf %117, %119 : vector<16x512xf32>
    %121 = arith.truncf %120 : vector<16x512xf32> to vector<16x512xbf16>
    %c0_98 = arith.constant 0 : index
    %c0_99 = arith.constant 0 : index
    %122 = vector.load %arg12[%c0_98, %c0_99] : memref<144x512xbf16, #tpu.memory_space<vmem>>, vector<16x512xbf16>
    tpu.vector_store %arg12[%c0_98, %c0_99], %121 {strides = array<i32>} : memref<144x512xbf16, #tpu.memory_space<vmem>>, vector<16x512xbf16>,
    %c16_i32_100 = arith.constant 16 : i32
    %123 = tpu.dynamic_rotate %116 by %c16_i32_100 dim 1 : vector<16x512xf32>, i32 -> vector<16x512xf32>
    %c1_101 = arith.constant 1 : index
    %c0_102 = arith.constant 0 : index
    %c0_103 = arith.constant 0 : index
    %124 = vector.load %arg2[%c1_101, %c0_102, %c0_103] : memref<9x16x512xf32, #tpu.memory_space<vmem>>, vector<1x16x512xf32>
    %125 = vector.shape_cast %124 : vector<1x16x512xf32> to vector<16x512xf32>
    %126 = arith.mulf %123, %125 : vector<16x512xf32>
    %127 = arith.truncf %126 : vector<16x512xf32> to vector<16x512xbf16>
    %c16_104 = arith.constant 16 : index
    %c0_105 = arith.constant 0 : index
    %128 = vector.load %arg12[%c16_104, %c0_105] : memref<144x512xbf16, #tpu.memory_space<vmem>>, vector<16x512xbf16>
    tpu.vector_store %arg12[%c16_104, %c0_105], %127 {strides = array<i32>} : memref<144x512xbf16, #tpu.memory_space<vmem>>, vector<16x512xbf16>,
    %c15_i32_106 = arith.constant 15 : i32
    %129 = tpu.dynamic_rotate %116 by %c15_i32_106 dim 1 : vector<16x512xf32>, i32 -> vector<16x512xf32>
    %c2_107 = arith.constant 2 : index
    %c0_108 = arith.constant 0 : index
    %c0_109 = arith.constant 0 : index
    %130 = vector.load %arg2[%c2_107, %c0_108, %c0_109] : memref<9x16x512xf32, #tpu.memory_space<vmem>>, vector<1x16x512xf32>
    %131 = vector.shape_cast %130 : vector<1x16x512xf32> to vector<16x512xf32>
    %132 = arith.mulf %129, %131 : vector<16x512xf32>
    %133 = arith.truncf %132 : vector<16x512xf32> to vector<16x512xbf16>
    %c32_110 = arith.constant 32 : index
    %c0_111 = arith.constant 0 : index
    %134 = vector.load %arg12[%c32_110, %c0_111] : memref<144x512xbf16, #tpu.memory_space<vmem>>, vector<16x512xbf16>
    tpu.vector_store %arg12[%c32_110, %c0_111], %133 {strides = array<i32>} : memref<144x512xbf16, #tpu.memory_space<vmem>>, vector<16x512xbf16>,
    %c1_i32_112 = arith.constant 1 : i32
    %135 = tpu.dynamic_rotate %116 by %c1_i32_112 dim 1 : vector<16x512xf32>, i32 -> vector<16x512xf32>
    %c3_113 = arith.constant 3 : index
    %c0_114 = arith.constant 0 : index
    %c0_115 = arith.constant 0 : index
    %136 = vector.load %arg2[%c3_113, %c0_114, %c0_115] : memref<9x16x512xf32, #tpu.memory_space<vmem>>, vector<1x16x512xf32>
    %137 = vector.shape_cast %136 : vector<1x16x512xf32> to vector<16x512xf32>
    %138 = arith.mulf %135, %137 : vector<16x512xf32>
    %139 = arith.truncf %138 : vector<16x512xf32> to vector<16x512xbf16>
    %c48_116 = arith.constant 48 : index
    %c0_117 = arith.constant 0 : index
    %140 = vector.load %arg12[%c48_116, %c0_117] : memref<144x512xbf16, #tpu.memory_space<vmem>>, vector<16x512xbf16>
    tpu.vector_store %arg12[%c48_116, %c0_117], %139 {strides = array<i32>} : memref<144x512xbf16, #tpu.memory_space<vmem>>, vector<16x512xbf16>,
    %141 = arith.truncf %116 : vector<16x512xf32> to vector<16x512xbf16>
    %c64_118 = arith.constant 64 : index
    %c0_119 = arith.constant 0 : index
    %142 = vector.load %arg12[%c64_118, %c0_119] : memref<144x512xbf16, #tpu.memory_space<vmem>>, vector<16x512xbf16>
    tpu.vector_store %arg12[%c64_118, %c0_119], %141 {strides = array<i32>} : memref<144x512xbf16, #tpu.memory_space<vmem>>, vector<16x512xbf16>,
    %c511_i32_120 = arith.constant 511 : i32
    %143 = tpu.dynamic_rotate %116 by %c511_i32_120 dim 1 : vector<16x512xf32>, i32 -> vector<16x512xf32>
    %c5_121 = arith.constant 5 : index
    %c0_122 = arith.constant 0 : index
    %c0_123 = arith.constant 0 : index
    %144 = vector.load %arg2[%c5_121, %c0_122, %c0_123] : memref<9x16x512xf32, #tpu.memory_space<vmem>>, vector<1x16x512xf32>
    %145 = vector.shape_cast %144 : vector<1x16x512xf32> to vector<16x512xf32>
    %146 = arith.mulf %143, %145 : vector<16x512xf32>
    %147 = arith.truncf %146 : vector<16x512xf32> to vector<16x512xbf16>
    %c80 = arith.constant 80 : index
    %c0_124 = arith.constant 0 : index
    %148 = vector.load %arg12[%c80, %c0_124] : memref<144x512xbf16, #tpu.memory_space<vmem>>, vector<16x512xbf16>
    tpu.vector_store %arg12[%c80, %c0_124], %147 {strides = array<i32>} : memref<144x512xbf16, #tpu.memory_space<vmem>>, vector<16x512xbf16>,
    %c497_i32_125 = arith.constant 497 : i32
    %149 = tpu.dynamic_rotate %116 by %c497_i32_125 dim 1 : vector<16x512xf32>, i32 -> vector<16x512xf32>
    %c6_126 = arith.constant 6 : index
    %c0_127 = arith.constant 0 : index
    %c0_128 = arith.constant 0 : index
    %150 = vector.load %arg2[%c6_126, %c0_127, %c0_128] : memref<9x16x512xf32, #tpu.memory_space<vmem>>, vector<1x16x512xf32>
    %151 = vector.shape_cast %150 : vector<1x16x512xf32> to vector<16x512xf32>
    %152 = arith.mulf %149, %151 : vector<16x512xf32>
    %153 = arith.truncf %152 : vector<16x512xf32> to vector<16x512xbf16>
    %c96 = arith.constant 96 : index
    %c0_129 = arith.constant 0 : index
    %154 = vector.load %arg12[%c96, %c0_129] : memref<144x512xbf16, #tpu.memory_space<vmem>>, vector<16x512xbf16>
    tpu.vector_store %arg12[%c96, %c0_129], %153 {strides = array<i32>} : memref<144x512xbf16, #tpu.memory_space<vmem>>, vector<16x512xbf16>,
    %c496_i32_130 = arith.constant 496 : i32
    %155 = tpu.dynamic_rotate %116 by %c496_i32_130 dim 1 : vector<16x512xf32>, i32 -> vector<16x512xf32>
    %c7_131 = arith.constant 7 : index
    %c0_132 = arith.constant 0 : index
    %c0_133 = arith.constant 0 : index
    %156 = vector.load %arg2[%c7_131, %c0_132, %c0_133] : memref<9x16x512xf32, #tpu.memory_space<vmem>>, vector<1x16x512xf32>
    %157 = vector.shape_cast %156 : vector<1x16x512xf32> to vector<16x512xf32>
    %158 = arith.mulf %155, %157 : vector<16x512xf32>
    %159 = arith.truncf %158 : vector<16x512xf32> to vector<16x512xbf16>
    %c112 = arith.constant 112 : index
    %c0_134 = arith.constant 0 : index
    %160 = vector.load %arg12[%c112, %c0_134] : memref<144x512xbf16, #tpu.memory_space<vmem>>, vector<16x512xbf16>
    tpu.vector_store %arg12[%c112, %c0_134], %159 {strides = array<i32>} : memref<144x512xbf16, #tpu.memory_space<vmem>>, vector<16x512xbf16>,
    %c495_i32_135 = arith.constant 495 : i32
    %161 = tpu.dynamic_rotate %116 by %c495_i32_135 dim 1 : vector<16x512xf32>, i32 -> vector<16x512xf32>
    %c8_136 = arith.constant 8 : index
    %c0_137 = arith.constant 0 : index
    %c0_138 = arith.constant 0 : index
    %162 = vector.load %arg2[%c8_136, %c0_137, %c0_138] : memref<9x16x512xf32, #tpu.memory_space<vmem>>, vector<1x16x512xf32>
    %163 = vector.shape_cast %162 : vector<1x16x512xf32> to vector<16x512xf32>
    %164 = arith.mulf %161, %163 : vector<16x512xf32>
    %165 = arith.truncf %164 : vector<16x512xf32> to vector<16x512xbf16>
    %c128 = arith.constant 128 : index
    %c0_139 = arith.constant 0 : index
    %166 = vector.load %arg12[%c128, %c0_139] : memref<144x512xbf16, #tpu.memory_space<vmem>>, vector<16x512xbf16>
    tpu.vector_store %arg12[%c128, %c0_139], %165 {strides = array<i32>} : memref<144x512xbf16, #tpu.memory_space<vmem>>, vector<16x512xbf16>,
    %c0_140 = arith.constant 0 : index
    %c0_141 = arith.constant 0 : index
    %167 = vector.load %arg7[%c0_140, %c0_141] : memref<8x144xbf16, #tpu.memory_space<vmem>>, vector<8x144xbf16>
    %c0_142 = arith.constant 0 : index
    %c0_143 = arith.constant 0 : index
    %168 = vector.load %arg12[%c0_142, %c0_143] : memref<144x512xbf16, #tpu.memory_space<vmem>>, vector<144x512xbf16>
    %cst_144 = arith.constant dense<0.000000e+00> : vector<8x512xf32>
    %169 = tpu.matmul %167, %168, %cst_144 {dimension_numbers = #tpu.dot_dimension_numbers<[1], [0], [0], [1], [0, 0, 1, 1], [], []>} : vector<8x144xbf16>, vector<144x512xbf16>, vector<8x512xf32> -> vector<8x512xf32>
    %c0_145 = arith.constant 0 : index
    %c0_146 = arith.constant 0 : index
    %170 = vector.load %arg8[%c0_145, %c0_146] : memref<8x1xf32, #tpu.memory_space<vmem>>, vector<8x1xf32>
    %171 = vector.broadcast %170 : vector<8x1xf32> to vector<8x512xf32>
    %172 = arith.addf %169, %171 : vector<8x512xf32>
    %cst_147 = arith.constant 0.000000e+00 : f32
    %173 = vector.broadcast %cst_147 : f32 to vector<8x512xf32>
    %174 = arith.maximumf %172, %173 : vector<8x512xf32>
    %c17_i32_148 = arith.constant 17 : i32
    %175 = tpu.dynamic_rotate %174 by %c17_i32_148 dim 1 : vector<8x512xf32>, i32 -> vector<8x512xf32>
    %c0_149 = arith.constant 0 : index
    %c0_150 = arith.constant 0 : index
    %c0_151 = arith.constant 0 : index
    %176 = vector.load %arg2[%c0_149, %c0_150, %c0_151] : memref<9x16x512xf32, #tpu.memory_space<vmem>>, vector<1x8x512xf32>
    %177 = vector.shape_cast %176 : vector<1x8x512xf32> to vector<8x512xf32>
    %178 = arith.mulf %175, %177 : vector<8x512xf32>
    %179 = arith.truncf %178 : vector<8x512xf32> to vector<8x512xbf16>
    %c0_152 = arith.constant 0 : index
    %c0_153 = arith.constant 0 : index
    %180 = vector.load %arg12[%c0_152, %c0_153] : memref<144x512xbf16, #tpu.memory_space<vmem>>, vector<8x512xbf16>
    tpu.vector_store %arg12[%c0_152, %c0_153], %179 {strides = array<i32>} : memref<144x512xbf16, #tpu.memory_space<vmem>>, vector<8x512xbf16>,
    %c16_i32_154 = arith.constant 16 : i32
    %181 = tpu.dynamic_rotate %174 by %c16_i32_154 dim 1 : vector<8x512xf32>, i32 -> vector<8x512xf32>
    %c1_155 = arith.constant 1 : index
    %c0_156 = arith.constant 0 : index
    %c0_157 = arith.constant 0 : index
    %182 = vector.load %arg2[%c1_155, %c0_156, %c0_157] : memref<9x16x512xf32, #tpu.memory_space<vmem>>, vector<1x8x512xf32>
    %183 = vector.shape_cast %182 : vector<1x8x512xf32> to vector<8x512xf32>
    %184 = arith.mulf %181, %183 : vector<8x512xf32>
    %185 = arith.truncf %184 : vector<8x512xf32> to vector<8x512xbf16>
    %c8_158 = arith.constant 8 : index
    %c0_159 = arith.constant 0 : index
    %186 = vector.load %arg12[%c8_158, %c0_159] : memref<144x512xbf16, #tpu.memory_space<vmem>>, vector<8x512xbf16>
    tpu.vector_store %arg12[%c8_158, %c0_159], %185 {strides = array<i32>} : memref<144x512xbf16, #tpu.memory_space<vmem>>, vector<8x512xbf16>,
    %c15_i32_160 = arith.constant 15 : i32
    %187 = tpu.dynamic_rotate %174 by %c15_i32_160 dim 1 : vector<8x512xf32>, i32 -> vector<8x512xf32>
    %c2_161 = arith.constant 2 : index
    %c0_162 = arith.constant 0 : index
    %c0_163 = arith.constant 0 : index
    %188 = vector.load %arg2[%c2_161, %c0_162, %c0_163] : memref<9x16x512xf32, #tpu.memory_space<vmem>>, vector<1x8x512xf32>
    %189 = vector.shape_cast %188 : vector<1x8x512xf32> to vector<8x512xf32>
    %190 = arith.mulf %187, %189 : vector<8x512xf32>
    %191 = arith.truncf %190 : vector<8x512xf32> to vector<8x512xbf16>
    %c16_164 = arith.constant 16 : index
    %c0_165 = arith.constant 0 : index
    %192 = vector.load %arg12[%c16_164, %c0_165] : memref<144x512xbf16, #tpu.memory_space<vmem>>, vector<8x512xbf16>
    tpu.vector_store %arg12[%c16_164, %c0_165], %191 {strides = array<i32>} : memref<144x512xbf16, #tpu.memory_space<vmem>>, vector<8x512xbf16>,
    %c1_i32_166 = arith.constant 1 : i32
    %193 = tpu.dynamic_rotate %174 by %c1_i32_166 dim 1 : vector<8x512xf32>, i32 -> vector<8x512xf32>
    %c3_167 = arith.constant 3 : index
    %c0_168 = arith.constant 0 : index
    %c0_169 = arith.constant 0 : index
    %194 = vector.load %arg2[%c3_167, %c0_168, %c0_169] : memref<9x16x512xf32, #tpu.memory_space<vmem>>, vector<1x8x512xf32>
    %195 = vector.shape_cast %194 : vector<1x8x512xf32> to vector<8x512xf32>
    %196 = arith.mulf %193, %195 : vector<8x512xf32>
    %197 = arith.truncf %196 : vector<8x512xf32> to vector<8x512xbf16>
    %c24_170 = arith.constant 24 : index
    %c0_171 = arith.constant 0 : index
    %198 = vector.load %arg12[%c24_170, %c0_171] : memref<144x512xbf16, #tpu.memory_space<vmem>>, vector<8x512xbf16>
    tpu.vector_store %arg12[%c24_170, %c0_171], %197 {strides = array<i32>} : memref<144x512xbf16, #tpu.memory_space<vmem>>, vector<8x512xbf16>,
    %199 = arith.truncf %174 : vector<8x512xf32> to vector<8x512xbf16>
    %c32_172 = arith.constant 32 : index
    %c0_173 = arith.constant 0 : index
    %200 = vector.load %arg12[%c32_172, %c0_173] : memref<144x512xbf16, #tpu.memory_space<vmem>>, vector<8x512xbf16>
    tpu.vector_store %arg12[%c32_172, %c0_173], %199 {strides = array<i32>} : memref<144x512xbf16, #tpu.memory_space<vmem>>, vector<8x512xbf16>,
    %c511_i32_174 = arith.constant 511 : i32
    %201 = tpu.dynamic_rotate %174 by %c511_i32_174 dim 1 : vector<8x512xf32>, i32 -> vector<8x512xf32>
    %c5_175 = arith.constant 5 : index
    %c0_176 = arith.constant 0 : index
    %c0_177 = arith.constant 0 : index
    %202 = vector.load %arg2[%c5_175, %c0_176, %c0_177] : memref<9x16x512xf32, #tpu.memory_space<vmem>>, vector<1x8x512xf32>
    %203 = vector.shape_cast %202 : vector<1x8x512xf32> to vector<8x512xf32>
    %204 = arith.mulf %201, %203 : vector<8x512xf32>
    %205 = arith.truncf %204 : vector<8x512xf32> to vector<8x512xbf16>
    %c40_178 = arith.constant 40 : index
    %c0_179 = arith.constant 0 : index
    %206 = vector.load %arg12[%c40_178, %c0_179] : memref<144x512xbf16, #tpu.memory_space<vmem>>, vector<8x512xbf16>
    tpu.vector_store %arg12[%c40_178, %c0_179], %205 {strides = array<i32>} : memref<144x512xbf16, #tpu.memory_space<vmem>>, vector<8x512xbf16>,
    %c497_i32_180 = arith.constant 497 : i32
    %207 = tpu.dynamic_rotate %174 by %c497_i32_180 dim 1 : vector<8x512xf32>, i32 -> vector<8x512xf32>
    %c6_181 = arith.constant 6 : index
    %c0_182 = arith.constant 0 : index
    %c0_183 = arith.constant 0 : index
    %208 = vector.load %arg2[%c6_181, %c0_182, %c0_183] : memref<9x16x512xf32, #tpu.memory_space<vmem>>, vector<1x8x512xf32>
    %209 = vector.shape_cast %208 : vector<1x8x512xf32> to vector<8x512xf32>
    %210 = arith.mulf %207, %209 : vector<8x512xf32>
    %211 = arith.truncf %210 : vector<8x512xf32> to vector<8x512xbf16>
    %c48_184 = arith.constant 48 : index
    %c0_185 = arith.constant 0 : index
    %212 = vector.load %arg12[%c48_184, %c0_185] : memref<144x512xbf16, #tpu.memory_space<vmem>>, vector<8x512xbf16>
    tpu.vector_store %arg12[%c48_184, %c0_185], %211 {strides = array<i32>} : memref<144x512xbf16, #tpu.memory_space<vmem>>, vector<8x512xbf16>,
    %c496_i32_186 = arith.constant 496 : i32
    %213 = tpu.dynamic_rotate %174 by %c496_i32_186 dim 1 : vector<8x512xf32>, i32 -> vector<8x512xf32>
    %c7_187 = arith.constant 7 : index
    %c0_188 = arith.constant 0 : index
    %c0_189 = arith.constant 0 : index
    %214 = vector.load %arg2[%c7_187, %c0_188, %c0_189] : memref<9x16x512xf32, #tpu.memory_space<vmem>>, vector<1x8x512xf32>
    %215 = vector.shape_cast %214 : vector<1x8x512xf32> to vector<8x512xf32>
    %216 = arith.mulf %213, %215 : vector<8x512xf32>
    %217 = arith.truncf %216 : vector<8x512xf32> to vector<8x512xbf16>
    %c56_190 = arith.constant 56 : index
    %c0_191 = arith.constant 0 : index
    %218 = vector.load %arg12[%c56_190, %c0_191] : memref<144x512xbf16, #tpu.memory_space<vmem>>, vector<8x512xbf16>
    tpu.vector_store %arg12[%c56_190, %c0_191], %217 {strides = array<i32>} : memref<144x512xbf16, #tpu.memory_space<vmem>>, vector<8x512xbf16>,
    %c495_i32_192 = arith.constant 495 : i32
    %219 = tpu.dynamic_rotate %174 by %c495_i32_192 dim 1 : vector<8x512xf32>, i32 -> vector<8x512xf32>
    %c8_193 = arith.constant 8 : index
    %c0_194 = arith.constant 0 : index
    %c0_195 = arith.constant 0 : index
    %220 = vector.load %arg2[%c8_193, %c0_194, %c0_195] : memref<9x16x512xf32, #tpu.memory_space<vmem>>, vector<1x8x512xf32>
    %221 = vector.shape_cast %220 : vector<1x8x512xf32> to vector<8x512xf32>
    %222 = arith.mulf %219, %221 : vector<8x512xf32>
    %223 = arith.truncf %222 : vector<8x512xf32> to vector<8x512xbf16>
    %c64_196 = arith.constant 64 : index
    %c0_197 = arith.constant 0 : index
    %224 = vector.load %arg12[%c64_196, %c0_197] : memref<144x512xbf16, #tpu.memory_space<vmem>>, vector<8x512xbf16>
    tpu.vector_store %arg12[%c64_196, %c0_197], %223 {strides = array<i32>} : memref<144x512xbf16, #tpu.memory_space<vmem>>, vector<8x512xbf16>,
    %c0_198 = arith.constant 0 : index
    %c0_199 = arith.constant 0 : index
    %225 = vector.load %arg9[%c0_198, %c0_199] : memref<8x72xbf16, #tpu.memory_space<vmem>>, vector<8x72xbf16>
    %c0_200 = arith.constant 0 : index
    %c0_201 = arith.constant 0 : index
    %226 = vector.load %arg12[%c0_200, %c0_201] : memref<144x512xbf16, #tpu.memory_space<vmem>>, vector<72x512xbf16>
    %cst_202 = arith.constant dense<0.000000e+00> : vector<8x512xf32>
    %227 = tpu.matmul %225, %226, %cst_202 {dimension_numbers = #tpu.dot_dimension_numbers<[1], [0], [0], [1], [0, 0, 1, 1], [], []>} : vector<8x72xbf16>, vector<72x512xbf16>, vector<8x512xf32> -> vector<8x512xf32>
    %c0_203 = arith.constant 0 : index
    %c0_204 = arith.constant 0 : index
    %228 = vector.load %arg10[%c0_203, %c0_204] : memref<8x1xf32, #tpu.memory_space<vmem>>, vector<8x1xf32>
    %229 = vector.broadcast %228 : vector<8x1xf32> to vector<8x512xf32>
    %230 = arith.addf %227, %229 : vector<8x512xf32>
    %c0_205 = arith.constant 0 : index
    %c0_206 = arith.constant 0 : index
    %231 = vector.load %arg11[%c0_205, %c0_206] : memref<8x512xf32, #tpu.memory_space<vmem>>, vector<8x512xf32>
    tpu.vector_store %arg11[%c0_205, %c0_206], %230 {strides = array<i32>} : memref<8x512xf32, #tpu.memory_space<vmem>>, vector<8x512xf32>,
    return
  }
  func.func @transform_0(%arg0: i32) -> (i32, i32) {
    %c0_i32 = arith.constant 0 : i32
    %c0_i32_0 = arith.constant 0 : i32
    return %c0_i32, %arg0 : i32, i32
  }
  func.func @transform_1(%arg0: i32) -> (i32, i32, i32) {
    %c0_i32 = arith.constant 0 : i32
    %c0_i32_0 = arith.constant 0 : i32
    %c0_i32_1 = arith.constant 0 : i32
    %c0_i32_2 = arith.constant 0 : i32
    return %c0_i32, %c0_i32_0, %c0_i32_1 : i32, i32, i32
  }
  func.func @transform_2(%arg0: i32) -> (i32, i32) {
    %c0_i32 = arith.constant 0 : i32
    %c0_i32_0 = arith.constant 0 : i32
    %c0_i32_1 = arith.constant 0 : i32
    return %c0_i32, %c0_i32_0 : i32, i32
  }
  func.func @transform_3(%arg0: i32) -> (i32, i32) {
    %c0_i32 = arith.constant 0 : i32
    %c0_i32_0 = arith.constant 0 : i32
    %c0_i32_1 = arith.constant 0 : i32
    return %c0_i32, %c0_i32_0 : i32, i32
  }
  func.func @transform_4(%arg0: i32) -> (i32, i32) {
    %c0_i32 = arith.constant 0 : i32
    %c0_i32_0 = arith.constant 0 : i32
    %c0_i32_1 = arith.constant 0 : i32
    return %c0_i32, %c0_i32_0 : i32, i32
  }
  func.func @transform_5(%arg0: i32) -> (i32, i32) {
    %c0_i32 = arith.constant 0 : i32
    %c0_i32_0 = arith.constant 0 : i32
    %c0_i32_1 = arith.constant 0 : i32
    return %c0_i32, %c0_i32_0 : i32, i32
  }
  func.func @transform_6(%arg0: i32) -> (i32, i32) {
    %c0_i32 = arith.constant 0 : i32
    %c0_i32_0 = arith.constant 0 : i32
    %c0_i32_1 = arith.constant 0 : i32
    return %c0_i32, %c0_i32_0 : i32, i32
  }
  func.func @transform_7(%arg0: i32) -> (i32, i32) {
    %c0_i32 = arith.constant 0 : i32
    %c0_i32_0 = arith.constant 0 : i32
    %c0_i32_1 = arith.constant 0 : i32
    return %c0_i32, %c0_i32_0 : i32, i32
  }
  func.func @transform_8(%arg0: i32) -> (i32, i32) {
    %c0_i32 = arith.constant 0 : i32
    %c0_i32_0 = arith.constant 0 : i32
    %c0_i32_1 = arith.constant 0 : i32
    return %c0_i32, %c0_i32_0 : i32, i32
  }
  func.func @transform_9(%arg0: i32) -> (i32, i32) {
    %c0_i32 = arith.constant 0 : i32
    %c0_i32_0 = arith.constant 0 : i32
    %c0_i32_1 = arith.constant 0 : i32
    return %c0_i32, %c0_i32_0 : i32, i32
  }
  func.func @transform_10(%arg0: i32) -> (i32, i32) {
    %c0_i32 = arith.constant 0 : i32
    %c0_i32_0 = arith.constant 0 : i32
    return %c0_i32, %arg0 : i32, i32
  }
}

</mosaic_0001>

<llo_original>
// kernel: combinatorial_forward.1
$region0: #{combinatorial_forward.1}
  #allocation0 [shape = 'u32[]', space=smem, size = 0x4, offset = 0x4, fixed_abs, tag = 'smem constant byte address 0x4 - core index']
  #allocation1 [shape = 'u32[144,128]{1,0:T(1,128)}', space=vmem, size = 0x12000, scoped, tag = 'internal scratch']
  #allocation2 [shape = 'bf16[144,512]{1,0:T(16,128)(2,1)}', space=vmem, size = 0x24000, scoped, tag = 'scratch operand']
  %s0 = inlined_call_operand.vmem [shape: f32[8,1024], index: 0, kind: input, shape index: {}]
  %s1 = inlined_call_operand.vmem [shape: f32[9,16,512], index: 1, kind: input, shape index: {}]
  %s2 = inlined_call_operand.vmem [shape: bf16[8,72], index: 2, kind: input, shape index: {}]
  %s3 = inlined_call_operand.vmem [shape: f32[8,1], index: 3, kind: input, shape index: {}]
  %s4 = inlined_call_operand.vmem [shape: bf16[16,72], index: 4, kind: input, shape index: {}]
  %s5 = inlined_call_operand.vmem [shape: f32[16,1], index: 5, kind: input, shape index: {}]
  %s6 = inlined_call_operand.vmem [shape: bf16[8,144], index: 6, kind: input, shape index: {}]
  %s7 = inlined_call_operand.vmem [shape: f32[8,1], index: 7, kind: input, shape index: {}]
  %s8 = inlined_call_operand.vmem [shape: bf16[8,72], index: 8, kind: input, shape index: {}]
  %s9 = inlined_call_operand.vmem [shape: f32[8,1], index: 9, kind: input, shape index: {}]
  %s10 = inlined_call_operand.vmem [shape: f32[8,1024], index: 10, kind: output, shape index: {}]
  %s11 = sld [smem:[#allocation0]]
  $region73: #{combinatorial_forward.1} parent=0
    _
  %s13 = ssub.s32 1, %s11
  %s14 = scalar_select 0, %s13, %s11
  loop: start=0, step=1, limit=4
  $region2: #{combinatorial_forward.1} parent=0 // loop_pre_header
    _
  $region3: #{combinatorial_forward.1} parent=0 // loop_header
    %s16 = sphi 0, %s20
    %p17 = scmp.ge.s32.totalorder %s16, 4
    %s26 = sphi 0, %s28
    %s29 = sphi 0, %s26
    %s30 = sphi 0, %s29
    %s46 = sphi 0, %s30
    %s50 = sphi 0, %s50
    %s52 = sphi 0, %s50
    %s53 = sphi 0, %s52
    %s67 = sphi 0, %s53
    %s71 = sphi 0, %s71
    %s73 = sphi 0, %s71
    %s74 = sphi 0, %s73
    %s88 = sphi 0, %s74
    %s92 = sphi 0, %s92
    %s94 = sphi 0, %s92
    %s95 = sphi 0, %s94
    %s109 = sphi 0, %s95
    %s113 = sphi 0, %s113
    %s115 = sphi 0, %s113
    %s116 = sphi 0, %s115
    %s130 = sphi 0, %s116
    %s134 = sphi 0, %s134
    %s136 = sphi 0, %s134
    %s137 = sphi 0, %s136
    %s151 = sphi 0, %s137
    %s155 = sphi 0, %s155
    %s157 = sphi 0, %s155
    %s158 = sphi 0, %s157
    %s172 = sphi 0, %s158
    %s176 = sphi 0, %s176
    %s178 = sphi 0, %s176
    %s179 = sphi 0, %s178
    %s193 = sphi 0, %s179
    %s197 = sphi 0, %s197
    %s199 = sphi 0, %s197
    %s200 = sphi 0, %s199
    %s214 = sphi 0, %s200
    %s218 = sphi 0, %s218
    %s220 = sphi 0, %s218
    %s221 = sphi 0, %s220
    %s235 = sphi 0, %s221
    %s241 = sphi 0, %s243
    %s244 = sphi 0, %s241
    %s245 = sphi 0, %s244
    %s261 = sphi 0, %s245
  $region4: #{combinatorial_forward.1} parent=0 // loop_header_branch
    %19 = sbr.rel (%p17) target = $region8
  $region5: #{combinatorial_forward.1} parent=0 // loop_body
    %s21 = ssub.s32 %s16, 1
    %s22 = ssub.s32 %s16, 2
    %s23 = sadd.s32 %s16, 1
    %s24 = ssub.s32 %s16, %s23
    %p25 = scmp.eq.s32.totalorder %s24, 0
    %s27 = sadd.s32 %s26, 1
    %s28 = scalar_select %p25, %s26, %s27
    %p31 = pneg %p25
    %p32 = scmp.eq.s32.totalorder %s16, 1
    %p33 = por %p31, %p32
    %p34 = scmp.ne.s32.totalorder %s26, %s29
    %p35 = scmp.eq.s32.totalorder %s16, 0
    %p36 = por %p34, %p35
    %p37 = scmp.ne.s32.totalorder %s26, %s29
    %p38 = scmp.eq.s32.totalorder %s21, 1
    %p39 = por %p37, %p38
    %p40 = scmp.ne.s32.totalorder %s29, %s30
    %p41 = scmp.eq.s32.totalorder %s21, 0
    %p42 = por %p40, %p41
    %p43 = scmp.ne.s32.totalorder %s29, %s30
    %p44 = scmp.eq.s32.totalorder %s22, 1
    %p45 = por %p43, %p44
    %p47 = scmp.ne.s32.totalorder %s30, %s46
    %p48 = scmp.eq.s32.totalorder %s22, 0
    %p49 = por %p47, %p48
    %s51 = sadd.s32 %s50, 1
    %p54 = scmp.eq.s32.totalorder %s16, 1
    %p55 = scmp.ne.s32.totalorder %s50, %s52
    %p56 = scmp.eq.s32.totalorder %s16, 0
    %p57 = por %p55, %p56
    %p58 = scmp.ne.s32.totalorder %s50, %s52
    %p59 = scmp.eq.s32.totalorder %s21, 1
    %p60 = por %p58, %p59
    %p61 = scmp.ne.s32.totalorder %s52, %s53
    %p62 = scmp.eq.s32.totalorder %s21, 0
    %p63 = por %p61, %p62
    %p64 = scmp.ne.s32.totalorder %s52, %s53
    %p65 = scmp.eq.s32.totalorder %s22, 1
    %p66 = por %p64, %p65
    %p68 = scmp.ne.s32.totalorder %s53, %s67
    %p69 = scmp.eq.s32.totalorder %s22, 0
    %p70 = por %p68, %p69
    %s72 = sadd.s32 %s71, 1
    %p75 = scmp.eq.s32.totalorder %s16, 1
    %p76 = scmp.ne.s32.totalorder %s71, %s73
    %p77 = scmp.eq.s32.totalorder %s16, 0
    %p78 = por %p76, %p77
    %p79 = scmp.ne.s32.totalorder %s71, %s73
    %p80 = scmp.eq.s32.totalorder %s21, 1
    %p81 = por %p79, %p80
    %p82 = scmp.ne.s32.totalorder %s73, %s74
    %p83 = scmp.eq.s32.totalorder %s21, 0
    %p84 = por %p82, %p83
    %p85 = scmp.ne.s32.totalorder %s73, %s74
    %p86 = scmp.eq.s32.totalorder %s22, 1
    %p87 = por %p85, %p86
    %p89 = scmp.ne.s32.totalorder %s74, %s88
    %p90 = scmp.eq.s32.totalorder %s22, 0
    %p91 = por %p89, %p90
    %s93 = sadd.s32 %s92, 1
    %p96 = scmp.eq.s32.totalorder %s16, 1
    %p97 = scmp.ne.s32.totalorder %s92, %s94
    %p98 = scmp.eq.s32.totalorder %s16, 0
    %p99 = por %p97, %p98
    %p100 = scmp.ne.s32.totalorder %s92, %s94
    %p101 = scmp.eq.s32.totalorder %s21, 1
    %p102 = por %p100, %p101
    %p103 = scmp.ne.s32.totalorder %s94, %s95
    %p104 = scmp.eq.s32.totalorder %s21, 0
    %p105 = por %p103, %p104
    %p106 = scmp.ne.s32.totalorder %s94, %s95
    %p107 = scmp.eq.s32.totalorder %s22, 1
    %p108 = por %p106, %p107
    %p110 = scmp.ne.s32.totalorder %s95, %s109
    %p111 = scmp.eq.s32.totalorder %s22, 0
    %p112 = por %p110, %p111
    %s114 = sadd.s32 %s113, 1
    %p117 = scmp.eq.s32.totalorder %s16, 1
    %p118 = scmp.ne.s32.totalorder %s113, %s115
    %p119 = scmp.eq.s32.totalorder %s16, 0
    %p120 = por %p118, %p119
    %p121 = scmp.ne.s32.totalorder %s113, %s115
    %p122 = scmp.eq.s32.totalorder %s21, 1
    %p123 = por %p121, %p122
    %p124 = scmp.ne.s32.totalorder %s115, %s116
    %p125 = scmp.eq.s32.totalorder %s21, 0
    %p126 = por %p124, %p125
    %p127 = scmp.ne.s32.totalorder %s115, %s116
    %p128 = scmp.eq.s32.totalorder %s22, 1
    %p129 = por %p127, %p128
    %p131 = scmp.ne.s32.totalorder %s116, %s130
    %p132 = scmp.eq.s32.totalorder %s22, 0
    %p133 = por %p131, %p132
    %s135 = sadd.s32 %s134, 1
    %p138 = scmp.eq.s32.totalorder %s16, 1
    %p139 = scmp.ne.s32.totalorder %s134, %s136
    %p140 = scmp.eq.s32.totalorder %s16, 0
    %p141 = por %p139, %p140
    %p142 = scmp.ne.s32.totalorder %s134, %s136
    %p143 = scmp.eq.s32.totalorder %s21, 1
    %p144 = por %p142, %p143
    %p145 = scmp.ne.s32.totalorder %s136, %s137
    %p146 = scmp.eq.s32.totalorder %s21, 0
    %p147 = por %p145, %p146
    %p148 = scmp.ne.s32.totalorder %s136, %s137
    %p149 = scmp.eq.s32.totalorder %s22, 1
    %p150 = por %p148, %p149
    %p152 = scmp.ne.s32.totalorder %s137, %s151
    %p153 = scmp.eq.s32.totalorder %s22, 0
    %p154 = por %p152, %p153
    %s156 = sadd.s32 %s155, 1
    %p159 = scmp.eq.s32.totalorder %s16, 1
    %p160 = scmp.ne.s32.totalorder %s155, %s157
    %p161 = scmp.eq.s32.totalorder %s16, 0
    %p162 = por %p160, %p161
    %p163 = scmp.ne.s32.totalorder %s155, %s157
    %p164 = scmp.eq.s32.totalorder %s21, 1
    %p165 = por %p163, %p164
    %p166 = scmp.ne.s32.totalorder %s157, %s158
    %p167 = scmp.eq.s32.totalorder %s21, 0
    %p168 = por %p166, %p167
    %p169 = scmp.ne.s32.totalorder %s157, %s158
    %p170 = scmp.eq.s32.totalorder %s22, 1
    %p171 = por %p169, %p170
    %p173 = scmp.ne.s32.totalorder %s158, %s172
    %p174 = scmp.eq.s32.totalorder %s22, 0
    %p175 = por %p173, %p174
    %s177 = sadd.s32 %s176, 1
    %p180 = scmp.eq.s32.totalorder %s16, 1
    %p181 = scmp.ne.s32.totalorder %s176, %s178
    %p182 = scmp.eq.s32.totalorder %s16, 0
    %p183 = por %p181, %p182
    %p184 = scmp.ne.s32.totalorder %s176, %s178
    %p185 = scmp.eq.s32.totalorder %s21, 1
    %p186 = por %p184, %p185
    %p187 = scmp.ne.s32.totalorder %s178, %s179
    %p188 = scmp.eq.s32.totalorder %s21, 0
    %p189 = por %p187, %p188
    %p190 = scmp.ne.s32.totalorder %s178, %s179
    %p191 = scmp.eq.s32.totalorder %s22, 1
    %p192 = por %p190, %p191
    %p194 = scmp.ne.s32.totalorder %s179, %s193
    %p195 = scmp.eq.s32.totalorder %s22, 0
    %p196 = por %p194, %p195
    %s198 = sadd.s32 %s197, 1
    %p201 = scmp.eq.s32.totalorder %s16, 1
    %p202 = scmp.ne.s32.totalorder %s197, %s199
    %p203 = scmp.eq.s32.totalorder %s16, 0
    %p204 = por %p202, %p203
    %p205 = scmp.ne.s32.totalorder %s197, %s199
    %p206 = scmp.eq.s32.totalorder %s21, 1
    %p207 = por %p205, %p206
    %p208 = scmp.ne.s32.totalorder %s199, %s200
    %p209 = scmp.eq.s32.totalorder %s21, 0
    %p210 = por %p208, %p209
    %p211 = scmp.ne.s32.totalorder %s199, %s200
    %p212 = scmp.eq.s32.totalorder %s22, 1
    %p213 = por %p211, %p212
    %p215 = scmp.ne.s32.totalorder %s200, %s214
    %p216 = scmp.eq.s32.totalorder %s22, 0
    %p217 = por %p215, %p216
    %s219 = sadd.s32 %s218, 1
    %p222 = scmp.eq.s32.totalorder %s16, 1
    %p223 = scmp.ne.s32.totalorder %s218, %s220
    %p224 = scmp.eq.s32.totalorder %s16, 0
    %p225 = por %p223, %p224
    %p226 = scmp.ne.s32.totalorder %s218, %s220
    %p227 = scmp.eq.s32.totalorder %s21, 1
    %p228 = por %p226, %p227
    %p229 = scmp.ne.s32.totalorder %s220, %s221
    %p230 = scmp.eq.s32.totalorder %s21, 0
    %p231 = por %p229, %p230
    %p232 = scmp.ne.s32.totalorder %s220, %s221
    %p233 = scmp.eq.s32.totalorder %s22, 1
    %p234 = por %p232, %p233
    %p236 = scmp.ne.s32.totalorder %s221, %s235
    %p237 = scmp.eq.s32.totalorder %s22, 0
    %p238 = por %p236, %p237
    %s239 = ssub.s32 %s16, %s23
    %p240 = scmp.eq.s32.totalorder %s239, 0
    %s242 = sadd.s32 %s241, 1
    %s243 = scalar_select %p240, %s241, %s242
    %p246 = pneg %p240
    %p247 = scmp.eq.s32.totalorder %s16, 1
    %p248 = por %p246, %p247
    %p249 = scmp.ne.s32.totalorder %s241, %s244
    %p250 = scmp.eq.s32.totalorder %s16, 0
    %p251 = por %p249, %p250
    %p252 = scmp.ne.s32.totalorder %s241, %s244
    %p253 = scmp.eq.s32.totalorder %s21, 1
    %p254 = por %p252, %p253
    %p255 = scmp.ne.s32.totalorder %s244, %s245
    %p256 = scmp.eq.s32.totalorder %s21, 0
    %p257 = por %p255, %p256
    %p258 = scmp.ne.s32.totalorder %s244, %s245
    %p259 = scmp.eq.s32.totalorder %s22, 1
    %p260 = por %p258, %p259
    %p262 = scmp.ne.s32.totalorder %s245, %s261
    %p263 = scmp.eq.s32.totalorder %s22, 0
    %p264 = por %p262, %p263
    %p265 = scmp.le.s32.totalorder 1, %s16
    %p266 = scmp.lt.s32.totalorder %s16, 3
    %p267 = pnand %p265, %p266
    %p268 = pneg %p267
    // Predicated region
    $region9: #{combinatorial_forward.1} parent=5 // pred_check
      _
    $region10: #{combinatorial_forward.1} parent=5 // pred_check_branch
      %270 = sbr.rel (%p267) target = $region12
    $region11: #{combinatorial_forward.1} parent=5 // pred_region
      %s271 = ssub.s32 %s16, 1
      // Predicated region
      $region13: #{combinatorial_forward.1} parent=11 // pred_check
        %p272 = pneg %p63
      $region14: #{combinatorial_forward.1} parent=11 // pred_check_branch
        %274 = sbr.rel (%p272) target = $region16
      $region15: #{combinatorial_forward.1} parent=11 // pred_region
        _
      $region16: #{combinatorial_forward.1} parent=11 // pred_fallthru
        _
      // Predicated region
      $region17: #{combinatorial_forward.1} parent=11 // pred_check
        %p275 = pneg %p84
      $region18: #{combinatorial_forward.1} parent=11 // pred_check_branch
        %277 = sbr.rel (%p275) target = $region20
      $region19: #{combinatorial_forward.1} parent=11 // pred_region
        _
      $region20: #{combinatorial_forward.1} parent=11 // pred_fallthru
        _
      // Predicated region
      $region21: #{combinatorial_forward.1} parent=11 // pred_check
        %p278 = pneg %p105
      $region22: #{combinatorial_forward.1} parent=11 // pred_check_branch
        %280 = sbr.rel (%p278) target = $region24
      $region23: #{combinatorial_forward.1} parent=11 // pred_region
        _
      $region24: #{combinatorial_forward.1} parent=11 // pred_fallthru
        _
      // Predicated region
      $region25: #{combinatorial_forward.1} parent=11 // pred_check
        %p281 = pneg %p126
      $region26: #{combinatorial_forward.1} parent=11 // pred_check_branch
        %283 = sbr.rel (%p281) target = $region28
      $region27: #{combinatorial_forward.1} parent=11 // pred_region
        _
      $region28: #{combinatorial_forward.1} parent=11 // pred_fallthru
        _
      // Predicated region
      $region29: #{combinatorial_forward.1} parent=11 // pred_check
        %p284 = pneg %p147
      $region30: #{combinatorial_forward.1} parent=11 // pred_check_branch
        %286 = sbr.rel (%p284) target = $region32
      $region31: #{combinatorial_forward.1} parent=11 // pred_region
        _
      $region32: #{combinatorial_forward.1} parent=11 // pred_fallthru
        _
      // Predicated region
      $region33: #{combinatorial_forward.1} parent=11 // pred_check
        %p287 = pneg %p168
      $region34: #{combinatorial_forward.1} parent=11 // pred_check_branch
        %289 = sbr.rel (%p287) target = $region36
      $region35: #{combinatorial_forward.1} parent=11 // pred_region
        _
      $region36: #{combinatorial_forward.1} parent=11 // pred_fallthru
        _
      // Predicated region
      $region37: #{combinatorial_forward.1} parent=11 // pred_check
        %p290 = pneg %p189
      $region38: #{combinatorial_forward.1} parent=11 // pred_check_branch
        %292 = sbr.rel (%p290) target = $region40
      $region39: #{combinatorial_forward.1} parent=11 // pred_region
        _
      $region40: #{combinatorial_forward.1} parent=11 // pred_fallthru
        _
      // Predicated region
      $region41: #{combinatorial_forward.1} parent=11 // pred_check
        %p293 = pneg %p210
      $region42: #{combinatorial_forward.1} parent=11 // pred_check_branch
        %295 = sbr.rel (%p293) target = $region44
      $region43: #{combinatorial_forward.1} parent=11 // pred_region
        _
      $region44: #{combinatorial_forward.1} parent=11 // pred_fallthru
        _
      // Predicated region
      $region45: #{combinatorial_forward.1} parent=11 // pred_check
        %p296 = pneg %p231
      $region46: #{combinatorial_forward.1} parent=11 // pred_check_branch
        %298 = sbr.rel (%p296) target = $region48
      $region47: #{combinatorial_forward.1} parent=11 // pred_region
        _
      $region48: #{combinatorial_forward.1} parent=11 // pred_fallthru
        _
    $region12: #{combinatorial_forward.1} parent=5 // pred_fallthru
      _
    %p299 = scmp.lt.s32.totalorder %s16, 2
    // Predicated region
    $region49: #{combinatorial_forward.1} parent=5 // pred_check
      %p300 = pneg %p299
    $region50: #{combinatorial_forward.1} parent=5 // pred_check_branch
      %302 = sbr.rel (%p300) target = $region52
    $region51: #{combinatorial_forward.1} parent=5 // pred_region
      // Predicated region
      $region53: #{combinatorial_forward.1} parent=51 // pred_check
        %p303 = pneg %p36
      $region54: #{combinatorial_forward.1} parent=51 // pred_check_branch
        %305 = sbr.rel (%p303) target = $region56
      $region55: #{combinatorial_forward.1} parent=51 // pred_region
        %s306 = smul.u32 4, %s16
        %p307 = scmp.lt.s32.totalorder %s306, 7
        %s308 = scalar_select %p307, %s306, 7
        %s309 = smul.addr %s308, 8
        %s310 = scalar_lea.vmem %s0, %s309
        %s311 = smul.u32 4, %s16
      $region56: #{combinatorial_forward.1} parent=51 // pred_fallthru
        _
    $region52: #{combinatorial_forward.1} parent=5 // pred_fallthru
      _
    %p312 = scmp.le.s32.totalorder 1, %s16
    %p313 = scmp.lt.s32.totalorder %s16, 3
    %p314 = pnand %p312, %p313
    %p315 = pneg %p314
    // Predicated region
    $region57: #{combinatorial_forward.1} parent=5 // pred_check
      _
    $region58: #{combinatorial_forward.1} parent=5 // pred_check_branch
      %317 = sbr.rel (%p314) target = $region60
    $region59: #{combinatorial_forward.1} parent=5 // pred_region
      %s318 = ssub.s32 %s16, 1
      %s319 = smul.u32 4, %s21
      %p320 = scmp.lt.s32.totalorder %s319, 7
      %s321 = scalar_select %p320, %s319, 7
      %s322 = smul.addr %s321, 8
      %s323 = scalar_lea.vmem %s0, %s322
      %p324 = pneg %p42
      %p325 = pneg %p39
      %p326 = pneg %p63
      %p327 = pneg %p60
      %p328 = pneg %p84
      %p329 = pneg %p81
      %p330 = pneg %p105
      %p331 = pneg %p102
      %p332 = pneg %p126
      %p333 = pneg %p123
      %p334 = pneg %p147
      %p335 = pneg %p144
      %p336 = pneg %p168
      %p337 = pneg %p165
      %p338 = pneg %p189
      %p339 = pneg %p186
      %p340 = pneg %p210
      %p341 = pneg %p207
      %p342 = pneg %p231
      %p343 = pneg %p228
      %p344 = pneg %p257
      %p345 = pneg %p254
      %s346 = smul.u32 4, %s21
      %p347 = scmp.lt.s32.totalorder %s346, 7
      %s348 = scalar_select %p347, %s346, 7
      %s349 = smul.addr %s348, 8
      %s350 = scalar_lea.vmem %s10, %s349
      %s351 = smul.u32 4, %s21
      %p352 = scmp.lt.s32.totalorder %s351, 7
      %s353 = scalar_select %p352, %s351, 7
      %s354 = smul.addr %s353, 8
      %s355 = scalar_lea.vmem %s0, %s354
      %s356 = smul.u32 4, %s21
      %s357 = smul.u32 4, %s21
      %p358 = scmp.lt.s32.totalorder %s357, 7
      %s359 = scalar_select %p358, %s357, 7
      %s360 = smul.addr %s359, 8
      %s361 = scalar_lea.vmem %s10, %s360
      %s362 = smul.u32 4, %s21
      %v364 = vld [vmem:[%s355] sm:$0xff]
      %v365 = vld [vmem:[%s355 + $0x8] sm:$0xff]
      %v366 = vld [vmem:[%s355 + $0x10] sm:$0xff]
      %v367 = vld [vmem:[%s355 + $0x18] sm:$0xff]
      %368 = vrot.lane.b32.xlu0 %v364, 17
      %v369 = vpop.permute.xlu0 %368
      %370 = vrot.lane.b32.xlu0 %v365, 17
      %v371 = vpop.permute.xlu0 %370
      %372 = vrot.lane.b32.xlu0 %v366, 17
      %v373 = vpop.permute.xlu0 %372
      %374 = vrot.lane.b32.xlu0 %v367, 17
      %v375 = vpop.permute.xlu0 %374
      %v376 = vlaneseq
      %v377 = vand.u32 %v376, 127
      %vm378 = vcmp.lt.s32.totalorder %v377, 17
      %v379 = vsel %vm378, %v373, %v375
      %v380 = vsel %vm378, %v371, %v373
      %v381 = vsel %vm378, %v369, %v371
      %v382 = vsel %vm378, %v375, %v369
      %v383 = vld [vmem:[%s1] sm:$0xff]
      %v384 = vld [vmem:[%s1 + $0x8] sm:$0xff]
      %v385 = vld [vmem:[%s1 + $0x10] sm:$0xff]
      %v386 = vld [vmem:[%s1 + $0x18] sm:$0xff]
      %v387 = vmul.f32 %v382, %v383
      %v388 = vmul.f32 %v381, %v384
      %v389 = vmul.f32 %v380, %v385
      %v390 = vmul.f32 %v379, %v386
      %v391 = vpack.c.bf16 %v387, %v387
      %v392 = vpack.c.bf16 %v388, %v388
      %v393 = vpack.c.bf16 %v389, %v389
      %v394 = vpack.c.bf16 %v390, %v390
      %395 = vst [vmem:[#allocation2] sm:$0xf] %v391
      %396 = vst [vmem:[#allocation2 + $0x8] sm:$0xf] %v392
      %397 = vst [vmem:[#allocation2 + $0x10] sm:$0xf] %v393
      %398 = vst [vmem:[#allocation2 + $0x18] sm:$0xf] %v394
      %399 = vrot.lane.b32.xlu0 %v364, 16
      %v400 = vpop.permute.xlu0 %399
      %401 = vrot.lane.b32.xlu0 %v365, 16
      %v402 = vpop.permute.xlu0 %401
      %403 = vrot.lane.b32.xlu0 %v366, 16
      %v404 = vpop.permute.xlu0 %403
      %405 = vrot.lane.b32.xlu0 %v367, 16
      %v406 = vpop.permute.xlu0 %405
      %vm407 = vcmp.lt.s32.totalorder %v377, 16
      %v408 = vsel %vm407, %v404, %v406
      %v409 = vsel %vm407, %v402, %v404
      %v410 = vsel %vm407, %v400, %v402
      %v411 = vsel %vm407, %v406, %v400
      %s412 = scalar_lea.vmem %s1, 64
      %v413 = vld [vmem:[%s412] sm:$0xff]
      %v414 = vld [vmem:[%s412 + $0x8] sm:$0xff]
      %v415 = vld [vmem:[%s412 + $0x10] sm:$0xff]
      %v416 = vld [vmem:[%s412 + $0x18] sm:$0xff]
      %v417 = vmul.f32 %v411, %v413
      %v418 = vmul.f32 %v410, %v414
      %v419 = vmul.f32 %v409, %v415
      %v420 = vmul.f32 %v408, %v416
      %v421 = vpack.c.bf16 %v417, %v417
      %v422 = vpack.c.bf16 %v418, %v418
      %v423 = vpack.c.bf16 %v419, %v419
      %v424 = vpack.c.bf16 %v420, %v420
      %v429 = vrot.slane %v421, 4
      %v430 = vrot.slane %v422, 4
      %v431 = vrot.slane %v423, 4
      %v432 = vrot.slane %v424, 4
      %437 = vst [vmem:[#allocation2] sm:$0xf0] %v429
      %438 = vst [vmem:[#allocation2 + $0x8] sm:$0xf0] %v430
      %439 = vst [vmem:[#allocation2 + $0x10] sm:$0xf0] %v431
      %440 = vst [vmem:[#allocation2 + $0x18] sm:$0xf0] %v432
      %441 = vrot.lane.b32.xlu0 %v364, 15
      %v442 = vpop.permute.xlu0 %441
      %443 = vrot.lane.b32.xlu0 %v365, 15
      %v444 = vpop.permute.xlu0 %443
      %445 = vrot.lane.b32.xlu0 %v366, 15
      %v446 = vpop.permute.xlu0 %445
      %447 = vrot.lane.b32.xlu0 %v367, 15
      %v448 = vpop.permute.xlu0 %447
      %vm449 = vcmp.lt.s32.totalorder %v377, 15
      %v450 = vsel %vm449, %v446, %v448
      %v451 = vsel %vm449, %v444, %v446
      %v452 = vsel %vm449, %v442, %v444
      %v453 = vsel %vm449, %v448, %v442
      %s454 = scalar_lea.vmem %s1, 128
      %v455 = vld [vmem:[%s454] sm:$0xff]
      %v456 = vld [vmem:[%s454 + $0x8] sm:$0xff]
      %v457 = vld [vmem:[%s454 + $0x10] sm:$0xff]
      %v458 = vld [vmem:[%s454 + $0x18] sm:$0xff]
      %v459 = vmul.f32 %v453, %v455
      %v460 = vmul.f32 %v452, %v456
      %v461 = vmul.f32 %v451, %v457
      %v462 = vmul.f32 %v450, %v458
      %v463 = vpack.c.bf16 %v459, %v459
      %v464 = vpack.c.bf16 %v460, %v460
      %v465 = vpack.c.bf16 %v461, %v461
      %v466 = vpack.c.bf16 %v462, %v462
      %467 = vst [vmem:[#allocation2 + $0x20] sm:$0xf] %v463
      %468 = vst [vmem:[#allocation2 + $0x28] sm:$0xf] %v464
      %469 = vst [vmem:[#allocation2 + $0x30] sm:$0xf] %v465
      %470 = vst [vmem:[#allocation2 + $0x38] sm:$0xf] %v466
      %471 = vrot.lane.b32.xlu0 %v364, 1
      %v472 = vpop.permute.xlu0 %471
      %473 = vrot.lane.b32.xlu0 %v365, 1
      %v474 = vpop.permute.xlu0 %473
      %475 = vrot.lane.b32.xlu0 %v366, 1
      %v476 = vpop.permute.xlu0 %475
      %477 = vrot.lane.b32.xlu0 %v367, 1
      %v478 = vpop.permute.xlu0 %477
      %vm479 = vcmp.lt.s32.totalorder %v377, 1
      %v480 = vsel %vm479, %v476, %v478
      %v481 = vsel %vm479, %v474, %v476
      %v482 = vsel %vm479, %v472, %v474
      %v483 = vsel %vm479, %v478, %v472
      %s484 = scalar_lea.vmem %s1, 192
      %v485 = vld [vmem:[%s484] sm:$0xff]
      %v486 = vld [vmem:[%s484 + $0x8] sm:$0xff]
      %v487 = vld [vmem:[%s484 + $0x10] sm:$0xff]
      %v488 = vld [vmem:[%s484 + $0x18] sm:$0xff]
      %v489 = vmul.f32 %v483, %v485
      %v490 = vmul.f32 %v482, %v486
      %v491 = vmul.f32 %v481, %v487
      %v492 = vmul.f32 %v480, %v488
      %v493 = vpack.c.bf16 %v489, %v489
      %v494 = vpack.c.bf16 %v490, %v490
      %v495 = vpack.c.bf16 %v491, %v491
      %v496 = vpack.c.bf16 %v492, %v492
      %v501 = vrot.slane %v493, 4
      %v502 = vrot.slane %v494, 4
      %v503 = vrot.slane %v495, 4
      %v504 = vrot.slane %v496, 4
      %509 = vst [vmem:[#allocation2 + $0x20] sm:$0xf0] %v501
      %510 = vst [vmem:[#allocation2 + $0x28] sm:$0xf0] %v502
      %511 = vst [vmem:[#allocation2 + $0x30] sm:$0xf0] %v503
      %512 = vst [vmem:[#allocation2 + $0x38] sm:$0xf0] %v504
      %v513 = vpack.c.bf16 %v364, %v364
      %v514 = vpack.c.bf16 %v365, %v365
      %v515 = vpack.c.bf16 %v366, %v366
      %v516 = vpack.c.bf16 %v367, %v367
      %517 = vst [vmem:[#allocation2 + $0x40] sm:$0xf] %v513
      %518 = vst [vmem:[#allocation2 + $0x48] sm:$0xf] %v514
      %519 = vst [vmem:[#allocation2 + $0x50] sm:$0xf] %v515
      %520 = vst [vmem:[#allocation2 + $0x58] sm:$0xf] %v516
      %521 = vrot.lane.b32.xlu0 %v364, 127
      %v522 = vpop.permute.xlu0 %521
      %523 = vrot.lane.b32.xlu0 %v365, 127
      %v524 = vpop.permute.xlu0 %523
      %525 = vrot.lane.b32.xlu0 %v366, 127
      %v526 = vpop.permute.xlu0 %525
      %527 = vrot.lane.b32.xlu0 %v367, 127
      %v528 = vpop.permute.xlu0 %527
      %vm529 = vcmp.lt.s32.totalorder %v377, 127
      %v530 = vsel %vm529, %v526, %v528
      %v531 = vsel %vm529, %v524, %v526
      %v532 = vsel %vm529, %v522, %v524
      %v533 = vsel %vm529, %v528, %v522
      %s534 = scalar_lea.vmem %s1, 320
      %v535 = vld [vmem:[%s534] sm:$0xff]
      %v536 = vld [vmem:[%s534 + $0x8] sm:$0xff]
      %v537 = vld [vmem:[%s534 + $0x10] sm:$0xff]
      %v538 = vld [vmem:[%s534 + $0x18] sm:$0xff]
      %v539 = vmul.f32 %v532, %v535
      %v540 = vmul.f32 %v531, %v536
      %v541 = vmul.f32 %v530, %v537
      %v542 = vmul.f32 %v533, %v538
      %v543 = vpack.c.bf16 %v539, %v539
      %v544 = vpack.c.bf16 %v540, %v540
      %v545 = vpack.c.bf16 %v541, %v541
      %v546 = vpack.c.bf16 %v542, %v542
      %v551 = vrot.slane %v543, 4
      %v552 = vrot.slane %v544, 4
      %v553 = vrot.slane %v545, 4
      %v554 = vrot.slane %v546, 4
      %559 = vst [vmem:[#allocation2 + $0x40] sm:$0xf0] %v551
      %560 = vst [vmem:[#allocation2 + $0x48] sm:$0xf0] %v552
      %561 = vst [vmem:[#allocation2 + $0x50] sm:$0xf0] %v553
      %562 = vst [vmem:[#allocation2 + $0x58] sm:$0xf0] %v554
      %563 = vrot.lane.b32.xlu0 %v364, 113
      %v564 = vpop.permute.xlu0 %563
      %565 = vrot.lane.b32.xlu0 %v365, 113
      %v566 = vpop.permute.xlu0 %565
      %567 = vrot.lane.b32.xlu0 %v366, 113
      %v568 = vpop.permute.xlu0 %567
      %569 = vrot.lane.b32.xlu0 %v367, 113
      %v570 = vpop.permute.xlu0 %569
      %vm571 = vcmp.lt.s32.totalorder %v377, 113
      %v572 = vsel %vm571, %v568, %v570
      %v573 = vsel %vm571, %v566, %v568
      %v574 = vsel %vm571, %v564, %v566
      %v575 = vsel %vm571, %v570, %v564
      %s576 = scalar_lea.vmem %s1, 384
      %v577 = vld [vmem:[%s576] sm:$0xff]
      %v578 = vld [vmem:[%s576 + $0x8] sm:$0xff]
      %v579 = vld [vmem:[%s576 + $0x10] sm:$0xff]
      %v580 = vld [vmem:[%s576 + $0x18] sm:$0xff]
      %v581 = vmul.f32 %v574, %v577
      %v582 = vmul.f32 %v573, %v578
      %v583 = vmul.f32 %v572, %v579
      %v584 = vmul.f32 %v575, %v580
      %v585 = vpack.c.bf16 %v581, %v581
      %v586 = vpack.c.bf16 %v582, %v582
      %v587 = vpack.c.bf16 %v583, %v583
      %v588 = vpack.c.bf16 %v584, %v584
      %589 = vst [vmem:[#allocation2 + $0x60] sm:$0xf] %v585
      %590 = vst [vmem:[#allocation2 + $0x68] sm:$0xf] %v586
      %591 = vst [vmem:[#allocation2 + $0x70] sm:$0xf] %v587
      %592 = vst [vmem:[#allocation2 + $0x78] sm:$0xf] %v588
      %593 = vrot.lane.b32.xlu0 %v364, 112
      %v594 = vpop.permute.xlu0 %593
      %595 = vrot.lane.b32.xlu0 %v365, 112
      %v596 = vpop.permute.xlu0 %595
      %597 = vrot.lane.b32.xlu0 %v366, 112
      %v598 = vpop.permute.xlu0 %597
      %599 = vrot.lane.b32.xlu0 %v367, 112
      %v600 = vpop.permute.xlu0 %599
      %vm601 = vcmp.lt.s32.totalorder %v377, 112
      %v602 = vsel %vm601, %v598, %v600
      %v603 = vsel %vm601, %v596, %v598
      %v604 = vsel %vm601, %v594, %v596
      %v605 = vsel %vm601, %v600, %v594
      %s606 = scalar_lea.vmem %s1, 448
      %v607 = vld [vmem:[%s606] sm:$0xff]
      %v608 = vld [vmem:[%s606 + $0x8] sm:$0xff]
      %v609 = vld [vmem:[%s606 + $0x10] sm:$0xff]
      %v610 = vld [vmem:[%s606 + $0x18] sm:$0xff]
      %v611 = vmul.f32 %v604, %v607
      %v612 = vmul.f32 %v603, %v608
      %v613 = vmul.f32 %v602, %v609
      %v614 = vmul.f32 %v605, %v610
      %v615 = vpack.c.bf16 %v611, %v611
      %v616 = vpack.c.bf16 %v612, %v612
      %v617 = vpack.c.bf16 %v613, %v613
      %v618 = vpack.c.bf16 %v614, %v614
      %v623 = vrot.slane %v615, 4
      %v624 = vrot.slane %v616, 4
      %v625 = vrot.slane %v617, 4
      %v626 = vrot.slane %v618, 4
      %631 = vst [vmem:[#allocation2 + $0x60] sm:$0xf0] %v623
      %632 = vst [vmem:[#allocation2 + $0x68] sm:$0xf0] %v624
      %633 = vst [vmem:[#allocation2 + $0x70] sm:$0xf0] %v625
      %634 = vst [vmem:[#allocation2 + $0x78] sm:$0xf0] %v626
      %635 = vrot.lane.b32.xlu0 %v364, 111
      %v636 = vpop.permute.xlu0 %635
      %637 = vrot.lane.b32.xlu0 %v365, 111
      %v638 = vpop.permute.xlu0 %637
      %639 = vrot.lane.b32.xlu0 %v366, 111
      %v640 = vpop.permute.xlu0 %639
      %641 = vrot.lane.b32.xlu0 %v367, 111
      %v642 = vpop.permute.xlu0 %641
      %vm643 = vcmp.lt.s32.totalorder %v377, 111
      %v644 = vsel %vm643, %v640, %v642
      %v645 = vsel %vm643, %v638, %v640
      %v646 = vsel %vm643, %v636, %v638
      %v647 = vsel %vm643, %v642, %v636
      %s648 = scalar_lea.vmem %s1, 512
      %v649 = vld [vmem:[%s648] sm:$0xff]
      %v650 = vld [vmem:[%s648 + $0x8] sm:$0xff]
      %v651 = vld [vmem:[%s648 + $0x10] sm:$0xff]
      %v652 = vld [vmem:[%s648 + $0x18] sm:$0xff]
      %v653 = vmul.f32 %v646, %v649
      %v654 = vmul.f32 %v645, %v650
      %v655 = vmul.f32 %v644, %v651
      %v656 = vmul.f32 %v647, %v652
      %v657 = vpack.c.bf16 %v653, %v653
      %v658 = vpack.c.bf16 %v654, %v654
      %v659 = vpack.c.bf16 %v655, %v655
      %v660 = vpack.c.bf16 %v656, %v656
      %661 = vst [vmem:[#allocation2 + $0x80] sm:$0xf] %v657
      %662 = vst [vmem:[#allocation2 + $0x88] sm:$0xf] %v658
      %663 = vst [vmem:[#allocation2 + $0x90] sm:$0xf] %v659
      %664 = vst [vmem:[#allocation2 + $0x98] sm:$0xf] %v660
      %v665 = vld [vmem:[%s2] sm:$0xf]
      %v666 = vld [vmem:[#allocation2] sm:$0xff]
      %v667 = vld [vmem:[#allocation2 + $0x8] sm:$0xff]
      %v668 = vld [vmem:[#allocation2 + $0x10] sm:$0xff]
      %v669 = vld [vmem:[#allocation2 + $0x18] sm:$0xff]
      %v670 = vld [vmem:[#allocation2 + $0x20] sm:$0xff]
      %v671 = vld [vmem:[#allocation2 + $0x28] sm:$0xff]
      %v672 = vld [vmem:[#allocation2 + $0x30] sm:$0xff]
      %v673 = vld [vmem:[#allocation2 + $0x38] sm:$0xff]
      %v674 = vld [vmem:[#allocation2 + $0x40] sm:$0xff]
      %v675 = vld [vmem:[#allocation2 + $0x48] sm:$0xff]
      %v676 = vld [vmem:[#allocation2 + $0x50] sm:$0xff]
      %v677 = vld [vmem:[#allocation2 + $0x58] sm:$0xff]
      %v678 = vld [vmem:[#allocation2 + $0x60] sm:$0xff]
      %v679 = vld [vmem:[#allocation2 + $0x68] sm:$0xff]
      %v680 = vld [vmem:[#allocation2 + $0x70] sm:$0xff]
      %v681 = vld [vmem:[#allocation2 + $0x78] sm:$0xff]
      %v682 = vld [vmem:[#allocation2 + $0x80] sm:$0xf]
      %v683 = vld [vmem:[#allocation2 + $0x88] sm:$0xf]
      %v684 = vld [vmem:[#allocation2 + $0x90] sm:$0xf]
      %v685 = vld [vmem:[#allocation2 + $0x98] sm:$0xf]
      %v686 = vld [vmem:[%s3] sm:$0xff]
      %688 = vset.pattern.permute.xlu0 0
      %689 = vperm.xlu0 %688, %v686
      %v690 = vpop.permute.xlu0 %689
      %vm692 = vcmask 588800
      %v694 = vsel %vm692, %v665, 0
      %vm696 = vcmask 1043456
      %v698 = vsel %vm696, %v682, 0
      %v701 = vsel %vm696, %v683, 0
      %v704 = vsel %vm696, %v684, 0
      %v707 = vsel %vm696, %v685, 0
      %709 = vmatprep.subr.bf16.mxu0 %v667
      %710 = vmatpush1.bf16.msra.mxu0 %v666
      %711 = vmatprep.subr.bf16.mxu0 %v671
      %712 = vmatpush1.bf16.msra.mxu0 %v670
      %713 = vmatprep.subr.bf16.mxu0 %v675
      %714 = vmatpush1.bf16.msra.mxu0 %v674
      %715 = vmatprep.subr.bf16.mxu0 %v679
      %716 = vmatpush1.bf16.msra.mxu0 %v678
      %717 = vmatprep.subr.bf16.mxu0 %v701
      %718 = vmatpush1.bf16.msra.mxu0 %v698
      %719 = vmatprep.subr.bf16.mxu0 0
      %720 = vmatpush1.bf16.msra.mxu0 0
      %721 = vmatprep.subr.bf16.mxu0 0
      %722 = vmatpush1.bf16.msra.mxu0 0
      %723 = vmatprep.subr.bf16.mxu0 0
      %724 = vmatpush1.bf16.msra.mxu0 0
      %725 = vmatprep.subr.bf16.mxu0 0
      %726 = vmatpush1.bf16.msra.mxu0 0
      %727 = vmatprep.subr.bf16.mxu0 0
      %728 = vmatpush1.bf16.msra.mxu0 0
      %729 = vmatprep.subr.bf16.mxu0 0
      %730 = vmatpush1.bf16.msra.mxu0 0
      %731 = vmatprep.subr.bf16.mxu0 0
      %732 = vmatpush1.bf16.msra.mxu0 0
      %733 = vmatprep.subr.bf16.mxu0 0
      %734 = vmatpush1.bf16.msra.mxu0 0
      %735 = vmatprep.subr.bf16.mxu0 0
      %736 = vmatpush1.bf16.msra.mxu0 0
      %737 = vmatprep.subr.bf16.mxu0 0
      %738 = vmatpush1.bf16.msra.mxu0 0
      %739 = vmatprep.subr.bf16.mxu0 0
      %740 = vmatpush1.bf16.msra.mxu0 0
      %741 = vmatprep.mubr.bf16.mxu0 0
      %742 = vmatmul.mubr.bf16.gmra.mrb[0].mxu0 %v694
      %v743 = vpop.f32.mrb[0].mxu0
      %v744 = vadd.f32 %v690, %v743
      %v745 = vpop.f32.mrb[0].mxu0
      %v746 = vadd.f32 %v690, %v745
      %v747 = vpop.f32.mrb[0].mxu0
      %v748 = vpop.f32.mrb[0].mxu0
      %749 = vdwg.mxu0
      %750 = vmatprep.subr.bf16.mxu0 %v669
      %751 = vmatpush1.bf16.msra.mxu0 %v668
      %752 = vmatprep.subr.bf16.mxu0 %v673
      %753 = vmatpush1.bf16.msra.mxu0 %v672
      %754 = vmatprep.subr.bf16.mxu0 %v677
      %755 = vmatpush1.bf16.msra.mxu0 %v676
      %756 = vmatprep.subr.bf16.mxu0 %v681
      %757 = vmatpush1.bf16.msra.mxu0 %v680
      %758 = vmatprep.subr.bf16.mxu0 %v707
      %759 = vmatpush1.bf16.msra.mxu0 %v704
      %760 = vmatprep.subr.bf16.mxu0 0
      %761 = vmatpush1.bf16.msra.mxu0 0
      %762 = vmatprep.subr.bf16.mxu0 0
      %763 = vmatpush1.bf16.msra.mxu0 0
      %764 = vmatprep.subr.bf16.mxu0 0
      %765 = vmatpush1.bf16.msra.mxu0 0
      %766 = vmatprep.subr.bf16.mxu0 0
      %767 = vmatpush1.bf16.msra.mxu0 0
      %768 = vmatprep.subr.bf16.mxu0 0
      %769 = vmatpush1.bf16.msra.mxu0 0
      %770 = vmatprep.subr.bf16.mxu0 0
      %771 = vmatpush1.bf16.msra.mxu0 0
      %772 = vmatprep.subr.bf16.mxu0 0
      %773 = vmatpush1.bf16.msra.mxu0 0
      %774 = vmatprep.subr.bf16.mxu0 0
      %775 = vmatpush1.bf16.msra.mxu0 0
      %776 = vmatprep.subr.bf16.mxu0 0
      %777 = vmatpush1.bf16.msra.mxu0 0
      %778 = vmatprep.subr.bf16.mxu0 0
      %779 = vmatpush1.bf16.msra.mxu0 0
      %780 = vmatprep.subr.bf16.mxu0 0
      %781 = vmatpush1.bf16.msra.mxu0 0
      %782 = vmatprep.mubr.bf16.mxu0 0
      %783 = vmatmul.mubr.bf16.gmra.mrb[0].mxu0 %v694
      %v784 = vpop.f32.mrb[0].mxu0
      %v785 = vadd.f32 %v690, %v784
      %v786 = vpop.f32.mrb[0].mxu0
      %v787 = vadd.f32 %v690, %v786
      %v788 = vpop.f32.mrb[0].mxu0
      %v789 = vpop.f32.mrb[0].mxu0
      %790 = vdwg.mxu0
      %v791 = vmax.f32 %v744, 0.0
      %v792 = vmax.f32 %v746, 0.0
      %v793 = vmax.f32 %v785, 0.0
      %v794 = vmax.f32 %v787, 0.0
      %795 = vrot.lane.b32.xlu0 %v791, 17
      %v796 = vpop.permute.xlu0 %795
      %797 = vrot.lane.b32.xlu0 %v792, 17
      %v798 = vpop.permute.xlu0 %797
      %799 = vrot.lane.b32.xlu0 %v793, 17
      %v800 = vpop.permute.xlu0 %799
      %801 = vrot.lane.b32.xlu0 %v794, 17
      %v802 = vpop.permute.xlu0 %801
      %v803 = vsel %vm378, %v800, %v802
      %v804 = vsel %vm378, %v798, %v800
      %v805 = vsel %vm378, %v796, %v798
      %v806 = vsel %vm378, %v802, %v796
      %v807 = vld [vmem:[%s1] sm:$0xff]
      %v808 = vld [vmem:[%s1 + $0x8] sm:$0xff]
      %v809 = vld [vmem:[%s1 + $0x10] sm:$0xff]
      %v810 = vld [vmem:[%s1 + $0x18] sm:$0xff]
      %v811 = vmul.f32 %v806, %v807
      %v812 = vmul.f32 %v805, %v808
      %v813 = vmul.f32 %v804, %v809
      %v814 = vmul.f32 %v803, %v810
      %v815 = vpack.c.bf16 %v811, %v811
      %v816 = vpack.c.bf16 %v812, %v812
      %v817 = vpack.c.bf16 %v813, %v813
      %v818 = vpack.c.bf16 %v814, %v814
      %819 = vst [vmem:[#allocation2] sm:$0xf] %v815
      %820 = vst [vmem:[#allocation2 + $0x8] sm:$0xf] %v816
      %821 = vst [vmem:[#allocation2 + $0x10] sm:$0xf] %v817
      %822 = vst [vmem:[#allocation2 + $0x18] sm:$0xf] %v818
      %823 = vrot.lane.b32.xlu0 %v791, 16
      %v824 = vpop.permute.xlu0 %823
      %825 = vrot.lane.b32.xlu0 %v792, 16
      %v826 = vpop.permute.xlu0 %825
      %827 = vrot.lane.b32.xlu0 %v793, 16
      %v828 = vpop.permute.xlu0 %827
      %829 = vrot.lane.b32.xlu0 %v794, 16
      %v830 = vpop.permute.xlu0 %829
      %v831 = vsel %vm407, %v828, %v830
      %v832 = vsel %vm407, %v826, %v828
      %v833 = vsel %vm407, %v824, %v826
      %v834 = vsel %vm407, %v830, %v824
      %v835 = vld [vmem:[%s412] sm:$0xff]
      %v836 = vld [vmem:[%s412 + $0x8] sm:$0xff]
      %v837 = vld [vmem:[%s412 + $0x10] sm:$0xff]
      %v838 = vld [vmem:[%s412 + $0x18] sm:$0xff]
      %v839 = vmul.f32 %v834, %v835
      %v840 = vmul.f32 %v833, %v836
      %v841 = vmul.f32 %v832, %v837
      %v842 = vmul.f32 %v831, %v838
      %v843 = vpack.c.bf16 %v839, %v839
      %v844 = vpack.c.bf16 %v840, %v840
      %v845 = vpack.c.bf16 %v841, %v841
      %v846 = vpack.c.bf16 %v842, %v842
      %v851 = vrot.slane %v843, 4
      %v852 = vrot.slane %v844, 4
      %v853 = vrot.slane %v845, 4
      %v854 = vrot.slane %v846, 4
      %859 = vst [vmem:[#allocation2] sm:$0xf0] %v851
      %860 = vst [vmem:[#allocation2 + $0x8] sm:$0xf0] %v852
      %861 = vst [vmem:[#allocation2 + $0x10] sm:$0xf0] %v853
      %862 = vst [vmem:[#allocation2 + $0x18] sm:$0xf0] %v854
      %863 = vrot.lane.b32.xlu0 %v791, 15
      %v864 = vpop.permute.xlu0 %863
      %865 = vrot.lane.b32.xlu0 %v792, 15
      %v866 = vpop.permute.xlu0 %865
      %867 = vrot.lane.b32.xlu0 %v793, 15
      %v868 = vpop.permute.xlu0 %867
      %869 = vrot.lane.b32.xlu0 %v794, 15
      %v870 = vpop.permute.xlu0 %869
      %v871 = vsel %vm449, %v868, %v870
      %v872 = vsel %vm449, %v866, %v868
      %v873 = vsel %vm449, %v864, %v866
      %v874 = vsel %vm449, %v870, %v864
      %v875 = vld [vmem:[%s454] sm:$0xff]
      %v876 = vld [vmem:[%s454 + $0x8] sm:$0xff]
      %v877 = vld [vmem:[%s454 + $0x10] sm:$0xff]
      %v878 = vld [vmem:[%s454 + $0x18] sm:$0xff]
      %v879 = vmul.f32 %v874, %v875
      %v880 = vmul.f32 %v873, %v876
      %v881 = vmul.f32 %v872, %v877
      %v882 = vmul.f32 %v871, %v878
      %v883 = vpack.c.bf16 %v879, %v879
      %v884 = vpack.c.bf16 %v880, %v880
      %v885 = vpack.c.bf16 %v881, %v881
      %v886 = vpack.c.bf16 %v882, %v882
      %887 = vst [vmem:[#allocation2 + $0x20] sm:$0xf] %v883
      %888 = vst [vmem:[#allocation2 + $0x28] sm:$0xf] %v884
      %889 = vst [vmem:[#allocation2 + $0x30] sm:$0xf] %v885
      %890 = vst [vmem:[#allocation2 + $0x38] sm:$0xf] %v886
      %891 = vrot.lane.b32.xlu0 %v791, 1
      %v892 = vpop.permute.xlu0 %891
      %893 = vrot.lane.b32.xlu0 %v792, 1
      %v894 = vpop.permute.xlu0 %893
      %895 = vrot.lane.b32.xlu0 %v793, 1
      %v896 = vpop.permute.xlu0 %895
      %897 = vrot.lane.b32.xlu0 %v794, 1
      %v898 = vpop.permute.xlu0 %897
      %v899 = vsel %vm479, %v896, %v898
      %v900 = vsel %vm479, %v894, %v896
      %v901 = vsel %vm479, %v892, %v894
      %v902 = vsel %vm479, %v898, %v892
      %v903 = vld [vmem:[%s484] sm:$0xff]
      %v904 = vld [vmem:[%s484 + $0x8] sm:$0xff]
      %v905 = vld [vmem:[%s484 + $0x10] sm:$0xff]
      %v906 = vld [vmem:[%s484 + $0x18] sm:$0xff]
      %v907 = vmul.f32 %v902, %v903
      %v908 = vmul.f32 %v901, %v904
      %v909 = vmul.f32 %v900, %v905
      %v910 = vmul.f32 %v899, %v906
      %v911 = vpack.c.bf16 %v907, %v907
      %v912 = vpack.c.bf16 %v908, %v908
      %v913 = vpack.c.bf16 %v909, %v909
      %v914 = vpack.c.bf16 %v910, %v910
      %v919 = vrot.slane %v911, 4
      %v920 = vrot.slane %v912, 4
      %v921 = vrot.slane %v913, 4
      %v922 = vrot.slane %v914, 4
      %927 = vst [vmem:[#allocation2 + $0x20] sm:$0xf0] %v919
      %928 = vst [vmem:[#allocation2 + $0x28] sm:$0xf0] %v920
      %929 = vst [vmem:[#allocation2 + $0x30] sm:$0xf0] %v921
      %930 = vst [vmem:[#allocation2 + $0x38] sm:$0xf0] %v922
      %v931 = vpack.c.bf16 %v791, %v791
      %v932 = vpack.c.bf16 %v792, %v792
      %v933 = vpack.c.bf16 %v793, %v793
      %v934 = vpack.c.bf16 %v794, %v794
      %935 = vst [vmem:[#allocation2 + $0x40] sm:$0xf] %v931
      %936 = vst [vmem:[#allocation2 + $0x48] sm:$0xf] %v932
      %937 = vst [vmem:[#allocation2 + $0x50] sm:$0xf] %v933
      %938 = vst [vmem:[#allocation2 + $0x58] sm:$0xf] %v934
      %939 = vrot.lane.b32.xlu0 %v791, 127
      %v940 = vpop.permute.xlu0 %939
      %941 = vrot.lane.b32.xlu0 %v792, 127
      %v942 = vpop.permute.xlu0 %941
      %943 = vrot.lane.b32.xlu0 %v793, 127
      %v944 = vpop.permute.xlu0 %943
      %945 = vrot.lane.b32.xlu0 %v794, 127
      %v946 = vpop.permute.xlu0 %945
      %v947 = vsel %vm529, %v944, %v946
      %v948 = vsel %vm529, %v942, %v944
      %v949 = vsel %vm529, %v940, %v942
      %v950 = vsel %vm529, %v946, %v940
      %v951 = vld [vmem:[%s534] sm:$0xff]
      %v952 = vld [vmem:[%s534 + $0x8] sm:$0xff]
      %v953 = vld [vmem:[%s534 + $0x10] sm:$0xff]
      %v954 = vld [vmem:[%s534 + $0x18] sm:$0xff]
      %v955 = vmul.f32 %v949, %v951
      %v956 = vmul.f32 %v948, %v952
      %v957 = vmul.f32 %v947, %v953
      %v958 = vmul.f32 %v950, %v954
      %v959 = vpack.c.bf16 %v955, %v955
      %v960 = vpack.c.bf16 %v956, %v956
      %v961 = vpack.c.bf16 %v957, %v957
      %v962 = vpack.c.bf16 %v958, %v958
      %v967 = vrot.slane %v959, 4
      %v968 = vrot.slane %v960, 4
      %v969 = vrot.slane %v961, 4
      %v970 = vrot.slane %v962, 4
      %975 = vst [vmem:[#allocation2 + $0x40] sm:$0xf0] %v967
      %976 = vst [vmem:[#allocation2 + $0x48] sm:$0xf0] %v968
      %977 = vst [vmem:[#allocation2 + $0x50] sm:$0xf0] %v969
      %978 = vst [vmem:[#allocation2 + $0x58] sm:$0xf0] %v970
      %979 = vrot.lane.b32.xlu0 %v791, 113
      %v980 = vpop.permute.xlu0 %979
      %981 = vrot.lane.b32.xlu0 %v792, 113
      %v982 = vpop.permute.xlu0 %981
      %983 = vrot.lane.b32.xlu0 %v793, 113
      %v984 = vpop.permute.xlu0 %983
      %985 = vrot.lane.b32.xlu0 %v794, 113
      %v986 = vpop.permute.xlu0 %985
      %v987 = vsel %vm571, %v984, %v986
      %v988 = vsel %vm571, %v982, %v984
      %v989 = vsel %vm571, %v980, %v982
      %v990 = vsel %vm571, %v986, %v980
      %v991 = vld [vmem:[%s576] sm:$0xff]
      %v992 = vld [vmem:[%s576 + $0x8] sm:$0xff]
      %v993 = vld [vmem:[%s576 + $0x10] sm:$0xff]
      %v994 = vld [vmem:[%s576 + $0x18] sm:$0xff]
      %v995 = vmul.f32 %v989, %v991
      %v996 = vmul.f32 %v988, %v992
      %v997 = vmul.f32 %v987, %v993
      %v998 = vmul.f32 %v990, %v994
      %v999 = vpack.c.bf16 %v995, %v995
      %v1000 = vpack.c.bf16 %v996, %v996
      %v1001 = vpack.c.bf16 %v997, %v997
      %v1002 = vpack.c.bf16 %v998, %v998
      %1003 = vst [vmem:[#allocation2 + $0x60] sm:$0xf] %v999
      %1004 = vst [vmem:[#allocation2 + $0x68] sm:$0xf] %v1000
      %1005 = vst [vmem:[#allocation2 + $0x70] sm:$0xf] %v1001
      %1006 = vst [vmem:[#allocation2 + $0x78] sm:$0xf] %v1002
      %1007 = vrot.lane.b32.xlu0 %v791, 112
      %v1008 = vpop.permute.xlu0 %1007
      %1009 = vrot.lane.b32.xlu0 %v792, 112
      %v1010 = vpop.permute.xlu0 %1009
      %1011 = vrot.lane.b32.xlu0 %v793, 112
      %v1012 = vpop.permute.xlu0 %1011
      %1013 = vrot.lane.b32.xlu0 %v794, 112
      %v1014 = vpop.permute.xlu0 %1013
      %v1015 = vsel %vm601, %v1012, %v1014
      %v1016 = vsel %vm601, %v1010, %v1012
      %v1017 = vsel %vm601, %v1008, %v1010
      %v1018 = vsel %vm601, %v1014, %v1008
      %v1019 = vld [vmem:[%s606] sm:$0xff]
      %v1020 = vld [vmem:[%s606 + $0x8] sm:$0xff]
      %v1021 = vld [vmem:[%s606 + $0x10] sm:$0xff]
      %v1022 = vld [vmem:[%s606 + $0x18] sm:$0xff]
      %v1023 = vmul.f32 %v1017, %v1019
      %v1024 = vmul.f32 %v1016, %v1020
      %v1025 = vmul.f32 %v1015, %v1021
      %v1026 = vmul.f32 %v1018, %v1022
      %v1027 = vpack.c.bf16 %v1023, %v1023
      %v1028 = vpack.c.bf16 %v1024, %v1024
      %v1029 = vpack.c.bf16 %v1025, %v1025
      %v1030 = vpack.c.bf16 %v1026, %v1026
      %v1035 = vrot.slane %v1027, 4
      %v1036 = vrot.slane %v1028, 4
      %v1037 = vrot.slane %v1029, 4
      %v1038 = vrot.slane %v1030, 4
      %1043 = vst [vmem:[#allocation2 + $0x60] sm:$0xf0] %v1035
      %1044 = vst [vmem:[#allocation2 + $0x68] sm:$0xf0] %v1036
      %1045 = vst [vmem:[#allocation2 + $0x70] sm:$0xf0] %v1037
      %1046 = vst [vmem:[#allocation2 + $0x78] sm:$0xf0] %v1038
      %1047 = vrot.lane.b32.xlu0 %v791, 111
      %v1048 = vpop.permute.xlu0 %1047
      %1049 = vrot.lane.b32.xlu0 %v792, 111
      %v1050 = vpop.permute.xlu0 %1049
      %1051 = vrot.lane.b32.xlu0 %v793, 111
      %v1052 = vpop.permute.xlu0 %1051
      %1053 = vrot.lane.b32.xlu0 %v794, 111
      %v1054 = vpop.permute.xlu0 %1053
      %v1055 = vsel %vm643, %v1052, %v1054
      %v1056 = vsel %vm643, %v1050, %v1052
      %v1057 = vsel %vm643, %v1048, %v1050
      %v1058 = vsel %vm643, %v1054, %v1048
      %v1059 = vld [vmem:[%s648] sm:$0xff]
      %v1060 = vld [vmem:[%s648 + $0x8] sm:$0xff]
      %v1061 = vld [vmem:[%s648 + $0x10] sm:$0xff]
      %v1062 = vld [vmem:[%s648 + $0x18] sm:$0xff]
      %v1063 = vmul.f32 %v1057, %v1059
      %v1064 = vmul.f32 %v1056, %v1060
      %v1065 = vmul.f32 %v1055, %v1061
      %v1066 = vmul.f32 %v1058, %v1062
      %v1067 = vpack.c.bf16 %v1063, %v1063
      %v1068 = vpack.c.bf16 %v1064, %v1064
      %v1069 = vpack.c.bf16 %v1065, %v1065
      %v1070 = vpack.c.bf16 %v1066, %v1066
      %1071 = vst [vmem:[#allocation2 + $0x80] sm:$0xf] %v1067
      %1072 = vst [vmem:[#allocation2 + $0x88] sm:$0xf] %v1068
      %1073 = vst [vmem:[#allocation2 + $0x90] sm:$0xf] %v1069
      %1074 = vst [vmem:[#allocation2 + $0x98] sm:$0xf] %v1070
      %v1075 = vld [vmem:[%s4] sm:$0xf]
      %v1076 = vld [vmem:[%s4 + $0x4] sm:$0xf]
      %v1077 = vld [vmem:[#allocation2] sm:$0xff]
      %v1078 = vld [vmem:[#allocation2 + $0x8] sm:$0xff]
      %v1079 = vld [vmem:[#allocation2 + $0x10] sm:$0xff]
      %v1080 = vld [vmem:[#allocation2 + $0x18] sm:$0xff]
      %v1081 = vld [vmem:[#allocation2 + $0x20] sm:$0xff]
      %v1082 = vld [vmem:[#allocation2 + $0x28] sm:$0xff]
      %v1083 = vld [vmem:[#allocation2 + $0x30] sm:$0xff]
      %v1084 = vld [vmem:[#allocation2 + $0x38] sm:$0xff]
      %v1085 = vld [vmem:[#allocation2 + $0x40] sm:$0xff]
      %v1086 = vld [vmem:[#allocation2 + $0x48] sm:$0xff]
      %v1087 = vld [vmem:[#allocation2 + $0x50] sm:$0xff]
      %v1088 = vld [vmem:[#allocation2 + $0x58] sm:$0xff]
      %v1089 = vld [vmem:[#allocation2 + $0x60] sm:$0xff]
      %v1090 = vld [vmem:[#allocation2 + $0x68] sm:$0xff]
      %v1091 = vld [vmem:[#allocation2 + $0x70] sm:$0xff]
      %v1092 = vld [vmem:[#allocation2 + $0x78] sm:$0xff]
      %v1093 = vld [vmem:[#allocation2 + $0x80] sm:$0xf]
      %v1094 = vld [vmem:[#allocation2 + $0x88] sm:$0xf]
      %v1095 = vld [vmem:[#allocation2 + $0x90] sm:$0xf]
      %v1096 = vld [vmem:[#allocation2 + $0x98] sm:$0xf]
      %v1097 = vld [vmem:[%s5] sm:$0xff]
      %v1098 = vld [vmem:[%s5 + $0x8] sm:$0xff]
      %1100 = vset.pattern.permute.xlu0 0
      %1101 = vperm.xlu0 %1100, %v1097
      %v1102 = vpop.permute.xlu0 %1101
      %1105 = vset.pattern.permute.xlu0 0
      %1106 = vperm.xlu0 %1105, %v1098
      %v1107 = vpop.permute.xlu0 %1106
      %v1111 = vunpack.c.l.b16 %v1075
      %v1112 = vunpack.c.l.b16 %v1076
      %v1113 = vpack.c.b16 %v1112, %v1111
      %v1115 = vsel %vm692, %v1113, 0
      %v1118 = vsel %vm696, %v1093, 0
      %v1121 = vsel %vm696, %v1094, 0
      %v1124 = vsel %vm696, %v1095, 0
      %v1127 = vsel %vm696, %v1096, 0
      %1129 = vmatprep.subr.bf16.mxu0 %v1078
      %1130 = vmatpush1.bf16.msra.mxu0 %v1077
      %1131 = vmatprep.subr.bf16.mxu0 %v1082
      %1132 = vmatpush1.bf16.msra.mxu0 %v1081
      %1133 = vmatprep.subr.bf16.mxu0 %v1086
      %1134 = vmatpush1.bf16.msra.mxu0 %v1085
      %1135 = vmatprep.subr.bf16.mxu0 %v1090
      %1136 = vmatpush1.bf16.msra.mxu0 %v1089
      %1137 = vmatprep.subr.bf16.mxu0 %v1121
      %1138 = vmatpush1.bf16.msra.mxu0 %v1118
      %1139 = vmatprep.subr.bf16.mxu0 0
      %1140 = vmatpush1.bf16.msra.mxu0 0
      %1141 = vmatprep.subr.bf16.mxu0 0
      %1142 = vmatpush1.bf16.msra.mxu0 0
      %1143 = vmatprep.subr.bf16.mxu0 0
      %1144 = vmatpush1.bf16.msra.mxu0 0
      %1145 = vmatprep.subr.bf16.mxu0 0
      %1146 = vmatpush1.bf16.msra.mxu0 0
      %1147 = vmatprep.subr.bf16.mxu0 0
      %1148 = vmatpush1.bf16.msra.mxu0 0
      %1149 = vmatprep.subr.bf16.mxu0 0
      %1150 = vmatpush1.bf16.msra.mxu0 0
      %1151 = vmatprep.subr.bf16.mxu0 0
      %1152 = vmatpush1.bf16.msra.mxu0 0
      %1153 = vmatprep.subr.bf16.mxu0 0
      %1154 = vmatpush1.bf16.msra.mxu0 0
      %1155 = vmatprep.subr.bf16.mxu0 0
      %1156 = vmatpush1.bf16.msra.mxu0 0
      %1157 = vmatprep.subr.bf16.mxu0 0
      %1158 = vmatpush1.bf16.msra.mxu0 0
      %1159 = vmatprep.subr.bf16.mxu0 0
      %1160 = vmatpush1.bf16.msra.mxu0 0
      %1161 = vmatprep.mubr.bf16.mxu0 0
      %1162 = vmatmul.mubr.bf16.gmra.mrb[0].mxu0 %v1115
      %v1163 = vpop.f32.mrb[0].mxu0
      %v1164 = vadd.f32 %v1102, %v1163
      %v1165 = vpop.f32.mrb[0].mxu0
      %v1166 = vadd.f32 %v1102, %v1165
      %v1167 = vpop.f32.mrb[0].mxu0
      %v1168 = vadd.f32 %v1107, %v1167
      %v1169 = vpop.f32.mrb[0].mxu0
      %v1170 = vadd.f32 %v1107, %v1169
      %1171 = vdwg.mxu0
      %1172 = vmatprep.subr.bf16.mxu0 %v1080
      %1173 = vmatpush1.bf16.msra.mxu0 %v1079
      %1174 = vmatprep.subr.bf16.mxu0 %v1084
      %1175 = vmatpush1.bf16.msra.mxu0 %v1083
      %1176 = vmatprep.subr.bf16.mxu0 %v1088
      %1177 = vmatpush1.bf16.msra.mxu0 %v1087
      %1178 = vmatprep.subr.bf16.mxu0 %v1092
      %1179 = vmatpush1.bf16.msra.mxu0 %v1091
      %1180 = vmatprep.subr.bf16.mxu0 %v1127
      %1181 = vmatpush1.bf16.msra.mxu0 %v1124
      %1182 = vmatprep.subr.bf16.mxu0 0
      %1183 = vmatpush1.bf16.msra.mxu0 0
      %1184 = vmatprep.subr.bf16.mxu0 0
      %1185 = vmatpush1.bf16.msra.mxu0 0
      %1186 = vmatprep.subr.bf16.mxu0 0
      %1187 = vmatpush1.bf16.msra.mxu0 0
      %1188 = vmatprep.subr.bf16.mxu0 0
      %1189 = vmatpush1.bf16.msra.mxu0 0
      %1190 = vmatprep.subr.bf16.mxu0 0
      %1191 = vmatpush1.bf16.msra.mxu0 0
      %1192 = vmatprep.subr.bf16.mxu0 0
      %1193 = vmatpush1.bf16.msra.mxu0 0
      %1194 = vmatprep.subr.bf16.mxu0 0
      %1195 = vmatpush1.bf16.msra.mxu0 0
      %1196 = vmatprep.subr.bf16.mxu0 0
      %1197 = vmatpush1.bf16.msra.mxu0 0
      %1198 = vmatprep.subr.bf16.mxu0 0
      %1199 = vmatpush1.bf16.msra.mxu0 0
      %1200 = vmatprep.subr.bf16.mxu0 0
      %1201 = vmatpush1.bf16.msra.mxu0 0
      %1202 = vmatprep.subr.bf16.mxu0 0
      %1203 = vmatpush1.bf16.msra.mxu0 0
      %1204 = vmatprep.mubr.bf16.mxu0 0
      %1205 = vmatmul.mubr.bf16.gmra.mrb[0].mxu0 %v1115
      %v1206 = vpop.f32.mrb[0].mxu0
      %v1207 = vadd.f32 %v1102, %v1206
      %v1208 = vpop.f32.mrb[0].mxu0
      %v1209 = vadd.f32 %v1102, %v1208
      %v1210 = vpop.f32.mrb[0].mxu0
      %v1211 = vadd.f32 %v1107, %v1210
      %v1212 = vpop.f32.mrb[0].mxu0
      %v1213 = vadd.f32 %v1107, %v1212
      %1214 = vdwg.mxu0
      %v1215 = vmax.f32 %v1164, 0.0
      %v1216 = vmax.f32 %v1166, 0.0
      %v1217 = vmax.f32 %v1207, 0.0
      %v1218 = vmax.f32 %v1209, 0.0
      %v1219 = vmax.f32 %v1168, 0.0
      %v1220 = vmax.f32 %v1170, 0.0
      %v1221 = vmax.f32 %v1211, 0.0
      %v1222 = vmax.f32 %v1213, 0.0
      %1223 = vrot.lane.b32.xlu0 %v1215, 17
      %v1224 = vpop.permute.xlu0 %1223
      %1225 = vrot.lane.b32.xlu0 %v1219, 17
      %v1226 = vpop.permute.xlu0 %1225
      %1227 = vrot.lane.b32.xlu0 %v1216, 17
      %v1228 = vpop.permute.xlu0 %1227
      %1229 = vrot.lane.b32.xlu0 %v1220, 17
      %v1230 = vpop.permute.xlu0 %1229
      %1231 = vrot.lane.b32.xlu0 %v1217, 17
      %v1232 = vpop.permute.xlu0 %1231
      %1233 = vrot.lane.b32.xlu0 %v1221, 17
      %v1234 = vpop.permute.xlu0 %1233
      %1235 = vrot.lane.b32.xlu0 %v1218, 17
      %v1236 = vpop.permute.xlu0 %1235
      %1237 = vrot.lane.b32.xlu0 %v1222, 17
      %v1238 = vpop.permute.xlu0 %1237
      %v1239 = vsel %vm378, %v1232, %v1236
      %v1240 = vsel %vm378, %v1234, %v1238
      %v1241 = vsel %vm378, %v1228, %v1232
      %v1242 = vsel %vm378, %v1230, %v1234
      %v1243 = vsel %vm378, %v1224, %v1228
      %v1244 = vsel %vm378, %v1226, %v1230
      %v1245 = vsel %vm378, %v1236, %v1224
      %v1246 = vsel %vm378, %v1238, %v1226
      %v1247 = vld [vmem:[%s1] sm:$0xff]
      %v1248 = vld [vmem:[%s1 + $0x8] sm:$0xff]
      %v1249 = vld [vmem:[%s1 + $0x10] sm:$0xff]
      %v1250 = vld [vmem:[%s1 + $0x18] sm:$0xff]
      %v1251 = vld [vmem:[%s1 + $0x20] sm:$0xff]
      %v1252 = vld [vmem:[%s1 + $0x28] sm:$0xff]
      %v1253 = vld [vmem:[%s1 + $0x30] sm:$0xff]
      %v1254 = vld [vmem:[%s1 + $0x38] sm:$0xff]
      %v1255 = vmul.f32 %v1245, %v1247
      %v1256 = vmul.f32 %v1243, %v1248
      %v1257 = vmul.f32 %v1241, %v1249
      %v1258 = vmul.f32 %v1239, %v1250
      %v1259 = vmul.f32 %v1246, %v1251
      %v1260 = vmul.f32 %v1244, %v1252
      %v1261 = vmul.f32 %v1242, %v1253
      %v1262 = vmul.f32 %v1240, %v1254
      %v1263 = vpack.c.bf16 %v1259, %v1255
      %v1264 = vpack.c.bf16 %v1260, %v1256
      %v1265 = vpack.c.bf16 %v1261, %v1257
      %v1266 = vpack.c.bf16 %v1262, %v1258
      %1267 = vst [vmem:[#allocation2] sm:$0xff] %v1263
      %1268 = vst [vmem:[#allocation2 + $0x8] sm:$0xff] %v1264
      %1269 = vst [vmem:[#allocation2 + $0x10] sm:$0xff] %v1265
      %1270 = vst [vmem:[#allocation2 + $0x18] sm:$0xff] %v1266
      %1271 = vrot.lane.b32.xlu0 %v1215, 16
      %v1272 = vpop.permute.xlu0 %1271
      %1273 = vrot.lane.b32.xlu0 %v1219, 16
      %v1274 = vpop.permute.xlu0 %1273
      %1275 = vrot.lane.b32.xlu0 %v1216, 16
      %v1276 = vpop.permute.xlu0 %1275
      %1277 = vrot.lane.b32.xlu0 %v1220, 16
      %v1278 = vpop.permute.xlu0 %1277
      %1279 = vrot.lane.b32.xlu0 %v1217, 16
      %v1280 = vpop.permute.xlu0 %1279
      %1281 = vrot.lane.b32.xlu0 %v1221, 16
      %v1282 = vpop.permute.xlu0 %1281
      %1283 = vrot.lane.b32.xlu0 %v1218, 16
      %v1284 = vpop.permute.xlu0 %1283
      %1285 = vrot.lane.b32.xlu0 %v1222, 16
      %v1286 = vpop.permute.xlu0 %1285
      %v1287 = vsel %vm407, %v1280, %v1284
      %v1288 = vsel %vm407, %v1282, %v1286
      %v1289 = vsel %vm407, %v1276, %v1280
      %v1290 = vsel %vm407, %v1278, %v1282
      %v1291 = vsel %vm407, %v1272, %v1276
      %v1292 = vsel %vm407, %v1274, %v1278
      %v1293 = vsel %vm407, %v1284, %v1272
      %v1294 = vsel %vm407, %v1286, %v1274
      %v1295 = vld [vmem:[%s412] sm:$0xff]
      %v1296 = vld [vmem:[%s412 + $0x8] sm:$0xff]
      %v1297 = vld [vmem:[%s412 + $0x10] sm:$0xff]
      %v1298 = vld [vmem:[%s412 + $0x18] sm:$0xff]
      %v1299 = vld [vmem:[%s412 + $0x20] sm:$0xff]
      %v1300 = vld [vmem:[%s412 + $0x28] sm:$0xff]
      %v1301 = vld [vmem:[%s412 + $0x30] sm:$0xff]
      %v1302 = vld [vmem:[%s412 + $0x38] sm:$0xff]
      %v1303 = vmul.f32 %v1293, %v1295
      %v1304 = vmul.f32 %v1291, %v1296
      %v1305 = vmul.f32 %v1289, %v1297
      %v1306 = vmul.f32 %v1287, %v1298
      %v1307 = vmul.f32 %v1294, %v1299
      %v1308 = vmul.f32 %v1292, %v1300
      %v1309 = vmul.f32 %v1290, %v1301
      %v1310 = vmul.f32 %v1288, %v1302
      %v1311 = vpack.c.bf16 %v1307, %v1303
      %v1312 = vpack.c.bf16 %v1308, %v1304
      %v1313 = vpack.c.bf16 %v1309, %v1305
      %v1314 = vpack.c.bf16 %v1310, %v1306
      %1315 = vst [vmem:[#allocation2 + $0x20] sm:$0xff] %v1311
      %1316 = vst [vmem:[#allocation2 + $0x28] sm:$0xff] %v1312
      %1317 = vst [vmem:[#allocation2 + $0x30] sm:$0xff] %v1313
      %1318 = vst [vmem:[#allocation2 + $0x38] sm:$0xff] %v1314
      %1319 = vrot.lane.b32.xlu0 %v1215, 15
      %v1320 = vpop.permute.xlu0 %1319
      %1321 = vrot.lane.b32.xlu0 %v1219, 15
      %v1322 = vpop.permute.xlu0 %1321
      %1323 = vrot.lane.b32.xlu0 %v1216, 15
      %v1324 = vpop.permute.xlu0 %1323
      %1325 = vrot.lane.b32.xlu0 %v1220, 15
      %v1326 = vpop.permute.xlu0 %1325
      %1327 = vrot.lane.b32.xlu0 %v1217, 15
      %v1328 = vpop.permute.xlu0 %1327
      %1329 = vrot.lane.b32.xlu0 %v1221, 15
      %v1330 = vpop.permute.xlu0 %1329
      %1331 = vrot.lane.b32.xlu0 %v1218, 15
      %v1332 = vpop.permute.xlu0 %1331
      %1333 = vrot.lane.b32.xlu0 %v1222, 15
      %v1334 = vpop.permute.xlu0 %1333
      %v1335 = vsel %vm449, %v1328, %v1332
      %v1336 = vsel %vm449, %v1330, %v1334
      %v1337 = vsel %vm449, %v1324, %v1328
      %v1338 = vsel %vm449, %v1326, %v1330
      %v1339 = vsel %vm449, %v1320, %v1324
      %v1340 = vsel %vm449, %v1322, %v1326
      %v1341 = vsel %vm449, %v1332, %v1320
      %v1342 = vsel %vm449, %v1334, %v1322
      %v1343 = vld [vmem:[%s454] sm:$0xff]
      %v1344 = vld [vmem:[%s454 + $0x8] sm:$0xff]
      %v1345 = vld [vmem:[%s454 + $0x10] sm:$0xff]
      %v1346 = vld [vmem:[%s454 + $0x18] sm:$0xff]
      %v1347 = vld [vmem:[%s454 + $0x20] sm:$0xff]
      %v1348 = vld [vmem:[%s454 + $0x28] sm:$0xff]
      %v1349 = vld [vmem:[%s454 + $0x30] sm:$0xff]
      %v1350 = vld [vmem:[%s454 + $0x38] sm:$0xff]
      %v1351 = vmul.f32 %v1341, %v1343
      %v1352 = vmul.f32 %v1339, %v1344
      %v1353 = vmul.f32 %v1337, %v1345
      %v1354 = vmul.f32 %v1335, %v1346
      %v1355 = vmul.f32 %v1342, %v1347
      %v1356 = vmul.f32 %v1340, %v1348
      %v1357 = vmul.f32 %v1338, %v1349
      %v1358 = vmul.f32 %v1336, %v1350
      %v1359 = vpack.c.bf16 %v1355, %v1351
      %v1360 = vpack.c.bf16 %v1356, %v1352
      %v1361 = vpack.c.bf16 %v1357, %v1353
      %v1362 = vpack.c.bf16 %v1358, %v1354
      %1363 = vst [vmem:[#allocation2 + $0x40] sm:$0xff] %v1359
      %1364 = vst [vmem:[#allocation2 + $0x48] sm:$0xff] %v1360
      %1365 = vst [vmem:[#allocation2 + $0x50] sm:$0xff] %v1361
      %1366 = vst [vmem:[#allocation2 + $0x58] sm:$0xff] %v1362
      %1367 = vrot.lane.b32.xlu0 %v1215, 1
      %v1368 = vpop.permute.xlu0 %1367
      %1369 = vrot.lane.b32.xlu0 %v1219, 1
      %v1370 = vpop.permute.xlu0 %1369
      %1371 = vrot.lane.b32.xlu0 %v1216, 1
      %v1372 = vpop.permute.xlu0 %1371
      %1373 = vrot.lane.b32.xlu0 %v1220, 1
      %v1374 = vpop.permute.xlu0 %1373
      %1375 = vrot.lane.b32.xlu0 %v1217, 1
      %v1376 = vpop.permute.xlu0 %1375
      %1377 = vrot.lane.b32.xlu0 %v1221, 1
      %v1378 = vpop.permute.xlu0 %1377
      %1379 = vrot.lane.b32.xlu0 %v1218, 1
      %v1380 = vpop.permute.xlu0 %1379
      %1381 = vrot.lane.b32.xlu0 %v1222, 1
      %v1382 = vpop.permute.xlu0 %1381
      %v1383 = vsel %vm479, %v1376, %v1380
      %v1384 = vsel %vm479, %v1378, %v1382
      %v1385 = vsel %vm479, %v1372, %v1376
      %v1386 = vsel %vm479, %v1374, %v1378
      %v1387 = vsel %vm479, %v1368, %v1372
      %v1388 = vsel %vm479, %v1370, %v1374
      %v1389 = vsel %vm479, %v1380, %v1368
      %v1390 = vsel %vm479, %v1382, %v1370
      %v1391 = vld [vmem:[%s484] sm:$0xff]
      %v1392 = vld [vmem:[%s484 + $0x8] sm:$0xff]
      %v1393 = vld [vmem:[%s484 + $0x10] sm:$0xff]
      %v1394 = vld [vmem:[%s484 + $0x18] sm:$0xff]
      %v1395 = vld [vmem:[%s484 + $0x20] sm:$0xff]
      %v1396 = vld [vmem:[%s484 + $0x28] sm:$0xff]
      %v1397 = vld [vmem:[%s484 + $0x30] sm:$0xff]
      %v1398 = vld [vmem:[%s484 + $0x38] sm:$0xff]
      %v1399 = vmul.f32 %v1389, %v1391
      %v1400 = vmul.f32 %v1387, %v1392
      %v1401 = vmul.f32 %v1385, %v1393
      %v1402 = vmul.f32 %v1383, %v1394
      %v1403 = vmul.f32 %v1390, %v1395
      %v1404 = vmul.f32 %v1388, %v1396
      %v1405 = vmul.f32 %v1386, %v1397
      %v1406 = vmul.f32 %v1384, %v1398
      %v1407 = vpack.c.bf16 %v1403, %v1399
      %v1408 = vpack.c.bf16 %v1404, %v1400
      %v1409 = vpack.c.bf16 %v1405, %v1401
      %v1410 = vpack.c.bf16 %v1406, %v1402
      %1411 = vst [vmem:[#allocation2 + $0x60] sm:$0xff] %v1407
      %1412 = vst [vmem:[#allocation2 + $0x68] sm:$0xff] %v1408
      %1413 = vst [vmem:[#allocation2 + $0x70] sm:$0xff] %v1409
      %1414 = vst [vmem:[#allocation2 + $0x78] sm:$0xff] %v1410
      %v1415 = vpack.c.bf16 %v1219, %v1215
      %v1416 = vpack.c.bf16 %v1220, %v1216
      %v1417 = vpack.c.bf16 %v1221, %v1217
      %v1418 = vpack.c.bf16 %v1222, %v1218
      %1419 = vst [vmem:[#allocation2 + $0x80] sm:$0xff] %v1415
      %1420 = vst [vmem:[#allocation2 + $0x88] sm:$0xff] %v1416
      %1421 = vst [vmem:[#allocation2 + $0x90] sm:$0xff] %v1417
      %1422 = vst [vmem:[#allocation2 + $0x98] sm:$0xff] %v1418
      %1423 = vrot.lane.b32.xlu0 %v1215, 127
      %v1424 = vpop.permute.xlu0 %1423
      %1425 = vrot.lane.b32.xlu0 %v1219, 127
      %v1426 = vpop.permute.xlu0 %1425
      %1427 = vrot.lane.b32.xlu0 %v1216, 127
      %v1428 = vpop.permute.xlu0 %1427
      %1429 = vrot.lane.b32.xlu0 %v1220, 127
      %v1430 = vpop.permute.xlu0 %1429
      %1431 = vrot.lane.b32.xlu0 %v1217, 127
      %v1432 = vpop.permute.xlu0 %1431
      %1433 = vrot.lane.b32.xlu0 %v1221, 127
      %v1434 = vpop.permute.xlu0 %1433
      %1435 = vrot.lane.b32.xlu0 %v1218, 127
      %v1436 = vpop.permute.xlu0 %1435
      %1437 = vrot.lane.b32.xlu0 %v1222, 127
      %v1438 = vpop.permute.xlu0 %1437
      %v1439 = vsel %vm529, %v1432, %v1436
      %v1440 = vsel %vm529, %v1434, %v1438
      %v1441 = vsel %vm529, %v1428, %v1432
      %v1442 = vsel %vm529, %v1430, %v1434
      %v1443 = vsel %vm529, %v1424, %v1428
      %v1444 = vsel %vm529, %v1426, %v1430
      %v1445 = vsel %vm529, %v1436, %v1424
      %v1446 = vsel %vm529, %v1438, %v1426
      %v1447 = vld [vmem:[%s534] sm:$0xff]
      %v1448 = vld [vmem:[%s534 + $0x8] sm:$0xff]
      %v1449 = vld [vmem:[%s534 + $0x10] sm:$0xff]
      %v1450 = vld [vmem:[%s534 + $0x18] sm:$0xff]
      %v1451 = vld [vmem:[%s534 + $0x20] sm:$0xff]
      %v1452 = vld [vmem:[%s534 + $0x28] sm:$0xff]
      %v1453 = vld [vmem:[%s534 + $0x30] sm:$0xff]
      %v1454 = vld [vmem:[%s534 + $0x38] sm:$0xff]
      %v1455 = vmul.f32 %v1443, %v1447
      %v1456 = vmul.f32 %v1441, %v1448
      %v1457 = vmul.f32 %v1439, %v1449
      %v1458 = vmul.f32 %v1445, %v1450
      %v1459 = vmul.f32 %v1444, %v1451
      %v1460 = vmul.f32 %v1442, %v1452
      %v1461 = vmul.f32 %v1440, %v1453
      %v1462 = vmul.f32 %v1446, %v1454
      %v1463 = vpack.c.bf16 %v1459, %v1455
      %v1464 = vpack.c.bf16 %v1460, %v1456
      %v1465 = vpack.c.bf16 %v1461, %v1457
      %v1466 = vpack.c.bf16 %v1462, %v1458
      %1467 = vst [vmem:[#allocation2 + $0xa0] sm:$0xff] %v1463
      %1468 = vst [vmem:[#allocation2 + $0xa8] sm:$0xff] %v1464
      %1469 = vst [vmem:[#allocation2 + $0xb0] sm:$0xff] %v1465
      %1470 = vst [vmem:[#allocation2 + $0xb8] sm:$0xff] %v1466
      %1471 = vrot.lane.b32.xlu0 %v1215, 113
      %v1472 = vpop.permute.xlu0 %1471
      %1473 = vrot.lane.b32.xlu0 %v1219, 113
      %v1474 = vpop.permute.xlu0 %1473
      %1475 = vrot.lane.b32.xlu0 %v1216, 113
      %v1476 = vpop.permute.xlu0 %1475
      %1477 = vrot.lane.b32.xlu0 %v1220, 113
      %v1478 = vpop.permute.xlu0 %1477
      %1479 = vrot.lane.b32.xlu0 %v1217, 113
      %v1480 = vpop.permute.xlu0 %1479
      %1481 = vrot.lane.b32.xlu0 %v1221, 113
      %v1482 = vpop.permute.xlu0 %1481
      %1483 = vrot.lane.b32.xlu0 %v1218, 113
      %v1484 = vpop.permute.xlu0 %1483
      %1485 = vrot.lane.b32.xlu0 %v1222, 113
      %v1486 = vpop.permute.xlu0 %1485
      %v1487 = vsel %vm571, %v1480, %v1484
      %v1488 = vsel %vm571, %v1482, %v1486
      %v1489 = vsel %vm571, %v1476, %v1480
      %v1490 = vsel %vm571, %v1478, %v1482
      %v1491 = vsel %vm571, %v1472, %v1476
      %v1492 = vsel %vm571, %v1474, %v1478
      %v1493 = vsel %vm571, %v1484, %v1472
      %v1494 = vsel %vm571, %v1486, %v1474
      %v1495 = vld [vmem:[%s576] sm:$0xff]
      %v1496 = vld [vmem:[%s576 + $0x8] sm:$0xff]
      %v1497 = vld [vmem:[%s576 + $0x10] sm:$0xff]
      %v1498 = vld [vmem:[%s576 + $0x18] sm:$0xff]
      %v1499 = vld [vmem:[%s576 + $0x20] sm:$0xff]
      %v1500 = vld [vmem:[%s576 + $0x28] sm:$0xff]
      %v1501 = vld [vmem:[%s576 + $0x30] sm:$0xff]
      %v1502 = vld [vmem:[%s576 + $0x38] sm:$0xff]
      %v1503 = vmul.f32 %v1491, %v1495
      %v1504 = vmul.f32 %v1489, %v1496
      %v1505 = vmul.f32 %v1487, %v1497
      %v1506 = vmul.f32 %v1493, %v1498
      %v1507 = vmul.f32 %v1492, %v1499
      %v1508 = vmul.f32 %v1490, %v1500
      %v1509 = vmul.f32 %v1488, %v1501
      %v1510 = vmul.f32 %v1494, %v1502
      %v1511 = vpack.c.bf16 %v1507, %v1503
      %v1512 = vpack.c.bf16 %v1508, %v1504
      %v1513 = vpack.c.bf16 %v1509, %v1505
      %v1514 = vpack.c.bf16 %v1510, %v1506
      %1515 = vst [vmem:[#allocation2 + $0xc0] sm:$0xff] %v1511
      %1516 = vst [vmem:[#allocation2 + $0xc8] sm:$0xff] %v1512
      %1517 = vst [vmem:[#allocation2 + $0xd0] sm:$0xff] %v1513
      %1518 = vst [vmem:[#allocation2 + $0xd8] sm:$0xff] %v1514
      %1519 = vrot.lane.b32.xlu0 %v1215, 112
      %v1520 = vpop.permute.xlu0 %1519
      %1521 = vrot.lane.b32.xlu0 %v1219, 112
      %v1522 = vpop.permute.xlu0 %1521
      %1523 = vrot.lane.b32.xlu0 %v1216, 112
      %v1524 = vpop.permute.xlu0 %1523
      %1525 = vrot.lane.b32.xlu0 %v1220, 112
      %v1526 = vpop.permute.xlu0 %1525
      %1527 = vrot.lane.b32.xlu0 %v1217, 112
      %v1528 = vpop.permute.xlu0 %1527
      %1529 = vrot.lane.b32.xlu0 %v1221, 112
      %v1530 = vpop.permute.xlu0 %1529
      %1531 = vrot.lane.b32.xlu0 %v1218, 112
      %v1532 = vpop.permute.xlu0 %1531
      %1533 = vrot.lane.b32.xlu0 %v1222, 112
      %v1534 = vpop.permute.xlu0 %1533
      %v1535 = vsel %vm601, %v1528, %v1532
      %v1536 = vsel %vm601, %v1530, %v1534
      %v1537 = vsel %vm601, %v1524, %v1528
      %v1538 = vsel %vm601, %v1526, %v1530
      %v1539 = vsel %vm601, %v1520, %v1524
      %v1540 = vsel %vm601, %v1522, %v1526
      %v1541 = vsel %vm601, %v1532, %v1520
      %v1542 = vsel %vm601, %v1534, %v1522
      %v1543 = vld [vmem:[%s606] sm:$0xff]
      %v1544 = vld [vmem:[%s606 + $0x8] sm:$0xff]
      %v1545 = vld [vmem:[%s606 + $0x10] sm:$0xff]
      %v1546 = vld [vmem:[%s606 + $0x18] sm:$0xff]
      %v1547 = vld [vmem:[%s606 + $0x20] sm:$0xff]
      %v1548 = vld [vmem:[%s606 + $0x28] sm:$0xff]
      %v1549 = vld [vmem:[%s606 + $0x30] sm:$0xff]
      %v1550 = vld [vmem:[%s606 + $0x38] sm:$0xff]
      %v1551 = vmul.f32 %v1539, %v1543
      %v1552 = vmul.f32 %v1537, %v1544
      %v1553 = vmul.f32 %v1535, %v1545
      %v1554 = vmul.f32 %v1541, %v1546
      %v1555 = vmul.f32 %v1540, %v1547
      %v1556 = vmul.f32 %v1538, %v1548
      %v1557 = vmul.f32 %v1536, %v1549
      %v1558 = vmul.f32 %v1542, %v1550
      %v1559 = vpack.c.bf16 %v1555, %v1551
      %v1560 = vpack.c.bf16 %v1556, %v1552
      %v1561 = vpack.c.bf16 %v1557, %v1553
      %v1562 = vpack.c.bf16 %v1558, %v1554
      %1563 = vst [vmem:[#allocation2 + $0xe0] sm:$0xff] %v1559
      %1564 = vst [vmem:[#allocation2 + $0xe8] sm:$0xff] %v1560
      %1565 = vst [vmem:[#allocation2 + $0xf0] sm:$0xff] %v1561
      %1566 = vst [vmem:[#allocation2 + $0xf8] sm:$0xff] %v1562
      %1567 = vrot.lane.b32.xlu0 %v1215, 111
      %v1568 = vpop.permute.xlu0 %1567
      %1569 = vrot.lane.b32.xlu0 %v1219, 111
      %v1570 = vpop.permute.xlu0 %1569
      %1571 = vrot.lane.b32.xlu0 %v1216, 111
      %v1572 = vpop.permute.xlu0 %1571
      %1573 = vrot.lane.b32.xlu0 %v1220, 111
      %v1574 = vpop.permute.xlu0 %1573
      %1575 = vrot.lane.b32.xlu0 %v1217, 111
      %v1576 = vpop.permute.xlu0 %1575
      %1577 = vrot.lane.b32.xlu0 %v1221, 111
      %v1578 = vpop.permute.xlu0 %1577
      %1579 = vrot.lane.b32.xlu0 %v1218, 111
      %v1580 = vpop.permute.xlu0 %1579
      %1581 = vrot.lane.b32.xlu0 %v1222, 111
      %v1582 = vpop.permute.xlu0 %1581
      %v1583 = vsel %vm643, %v1576, %v1580
      %v1584 = vsel %vm643, %v1578, %v1582
      %v1585 = vsel %vm643, %v1572, %v1576
      %v1586 = vsel %vm643, %v1574, %v1578
      %v1587 = vsel %vm643, %v1568, %v1572
      %v1588 = vsel %vm643, %v1570, %v1574
      %v1589 = vsel %vm643, %v1580, %v1568
      %v1590 = vsel %vm643, %v1582, %v1570
      %v1591 = vld [vmem:[%s648] sm:$0xff]
      %v1592 = vld [vmem:[%s648 + $0x8] sm:$0xff]
      %v1593 = vld [vmem:[%s648 + $0x10] sm:$0xff]
      %v1594 = vld [vmem:[%s648 + $0x18] sm:$0xff]
      %v1595 = vld [vmem:[%s648 + $0x20] sm:$0xff]
      %v1596 = vld [vmem:[%s648 + $0x28] sm:$0xff]
      %v1597 = vld [vmem:[%s648 + $0x30] sm:$0xff]
      %v1598 = vld [vmem:[%s648 + $0x38] sm:$0xff]
      %v1599 = vmul.f32 %v1587, %v1591
      %v1600 = vmul.f32 %v1585, %v1592
      %v1601 = vmul.f32 %v1583, %v1593
      %v1602 = vmul.f32 %v1589, %v1594
      %v1603 = vmul.f32 %v1588, %v1595
      %v1604 = vmul.f32 %v1586, %v1596
      %v1605 = vmul.f32 %v1584, %v1597
      %v1606 = vmul.f32 %v1590, %v1598
      %v1607 = vpack.c.bf16 %v1603, %v1599
      %v1608 = vpack.c.bf16 %v1604, %v1600
      %v1609 = vpack.c.bf16 %v1605, %v1601
      %v1610 = vpack.c.bf16 %v1606, %v1602
      %1611 = vst [vmem:[#allocation2 + $0x100] sm:$0xff] %v1607
      %1612 = vst [vmem:[#allocation2 + $0x108] sm:$0xff] %v1608
      %1613 = vst [vmem:[#allocation2 + $0x110] sm:$0xff] %v1609
      %1614 = vst [vmem:[#allocation2 + $0x118] sm:$0xff] %v1610
      %v1615 = vld [vmem:[%s6] sm:$0xff]
      %v1616 = vld [vmem:[#allocation2] sm:$0xff]
      %v1617 = vld [vmem:[#allocation2 + $0x8] sm:$0xff]
      %v1618 = vld [vmem:[#allocation2 + $0x10] sm:$0xff]
      %v1619 = vld [vmem:[#allocation2 + $0x18] sm:$0xff]
      %v1620 = vld [vmem:[#allocation2 + $0x20] sm:$0xff]
      %v1621 = vld [vmem:[#allocation2 + $0x28] sm:$0xff]
      %v1622 = vld [vmem:[#allocation2 + $0x30] sm:$0xff]
      %v1623 = vld [vmem:[#allocation2 + $0x38] sm:$0xff]
      %v1624 = vld [vmem:[#allocation2 + $0x40] sm:$0xff]
      %v1625 = vld [vmem:[#allocation2 + $0x48] sm:$0xff]
      %v1626 = vld [vmem:[#allocation2 + $0x50] sm:$0xff]
      %v1627 = vld [vmem:[#allocation2 + $0x58] sm:$0xff]
      %v1628 = vld [vmem:[#allocation2 + $0x60] sm:$0xff]
      %v1629 = vld [vmem:[#allocation2 + $0x68] sm:$0xff]
      %v1630 = vld [vmem:[#allocation2 + $0x70] sm:$0xff]
      %v1631 = vld [vmem:[#allocation2 + $0x78] sm:$0xff]
      %v1632 = vld [vmem:[#allocation2 + $0x80] sm:$0xff]
      %v1633 = vld [vmem:[#allocation2 + $0x88] sm:$0xff]
      %v1634 = vld [vmem:[#allocation2 + $0x90] sm:$0xff]
      %v1635 = vld [vmem:[#allocation2 + $0x98] sm:$0xff]
      %v1636 = vld [vmem:[#allocation2 + $0xa0] sm:$0xff]
      %v1637 = vld [vmem:[#allocation2 + $0xa8] sm:$0xff]
      %v1638 = vld [vmem:[#allocation2 + $0xb0] sm:$0xff]
      %v1639 = vld [vmem:[#allocation2 + $0xb8] sm:$0xff]
      %v1640 = vld [vmem:[#allocation2 + $0xc0] sm:$0xff]
      %v1641 = vld [vmem:[#allocation2 + $0xc8] sm:$0xff]
      %v1642 = vld [vmem:[#allocation2 + $0xd0] sm:$0xff]
      %v1643 = vld [vmem:[#allocation2 + $0xd8] sm:$0xff]
      %v1644 = vld [vmem:[#allocation2 + $0xe0] sm:$0xff]
      %v1645 = vld [vmem:[#allocation2 + $0xe8] sm:$0xff]
      %v1646 = vld [vmem:[#allocation2 + $0xf0] sm:$0xff]
      %v1647 = vld [vmem:[#allocation2 + $0xf8] sm:$0xff]
      %v1648 = vld [vmem:[#allocation2 + $0x100] sm:$0xff]
      %v1649 = vld [vmem:[#allocation2 + $0x108] sm:$0xff]
      %v1650 = vld [vmem:[#allocation2 + $0x110] sm:$0xff]
      %v1651 = vld [vmem:[#allocation2 + $0x118] sm:$0xff]
      %v1652 = vld [vmem:[%s7] sm:$0xff]
      %1654 = vset.pattern.permute.xlu0 0
      %1655 = vperm.xlu0 %1654, %v1652
      %v1656 = vpop.permute.xlu0 %1655
      %v1659 = vunpack.c.l.b16 %v1615
      %v1660 = vunpack.c.h.b16 %v1615
      %v1661 = vpack.c.b16 %v1659, %v1659
      %v1662 = vpack.c.b16 %v1660, %v1660
      %vm1664 = vcmask 130048
      %v1666 = vsel %vm1664, %v1662, 0
      %1668 = vmatprep.subr.bf16.mxu0 %v1617
      %1669 = vmatpush1.bf16.msra.mxu0 %v1616
      %1670 = vmatprep.subr.bf16.mxu0 %v1621
      %1671 = vmatpush1.bf16.msra.mxu0 %v1620
      %1672 = vmatprep.subr.bf16.mxu0 %v1625
      %1673 = vmatpush1.bf16.msra.mxu0 %v1624
      %1674 = vmatprep.subr.bf16.mxu0 %v1629
      %1675 = vmatpush1.bf16.msra.mxu0 %v1628
      %1676 = vmatprep.subr.bf16.mxu0 %v1633
      %1677 = vmatpush1.bf16.msra.mxu0 %v1632
      %1678 = vmatprep.subr.bf16.mxu0 %v1637
      %1679 = vmatpush1.bf16.msra.mxu0 %v1636
      %1680 = vmatprep.subr.bf16.mxu0 %v1641
      %1681 = vmatpush1.bf16.msra.mxu0 %v1640
      %1682 = vmatprep.subr.bf16.mxu0 %v1645
      %1683 = vmatpush1.bf16.msra.mxu0 %v1644
      %1684 = vmatprep.subr.bf16.mxu0 %v1649
      %1685 = vmatpush1.bf16.msra.mxu0 %v1648
      %1686 = vmatprep.subr.bf16.mxu0 0
      %1687 = vmatpush1.bf16.msra.mxu0 0
      %1688 = vmatprep.subr.bf16.mxu0 0
      %1689 = vmatpush1.bf16.msra.mxu0 0
      %1690 = vmatprep.subr.bf16.mxu0 0
      %1691 = vmatpush1.bf16.msra.mxu0 0
      %1692 = vmatprep.subr.bf16.mxu0 0
      %1693 = vmatpush1.bf16.msra.mxu0 0
      %1694 = vmatprep.subr.bf16.mxu0 0
      %1695 = vmatpush1.bf16.msra.mxu0 0
      %1696 = vmatprep.subr.bf16.mxu0 0
      %1697 = vmatpush1.bf16.msra.mxu0 0
      %1698 = vmatprep.subr.bf16.mxu0 0
      %1699 = vmatpush1.bf16.msra.mxu0 0
      %1700 = vmatprep.mubr.bf16.mxu0 %v1666
      %1701 = vmatmul.mubr.bf16.gmra.mrb[0].mxu0 %v1661
      %v1702 = vpop.f32.mrb[0].mxu0
      %v1703 = vadd.f32 %v1656, %v1702
      %v1704 = vpop.f32.mrb[0].mxu0
      %v1705 = vadd.f32 %v1656, %v1704
      %v1706 = vpop.f32.mrb[0].mxu0
      %v1707 = vpop.f32.mrb[0].mxu0
      %1708 = vdwg.mxu0
      %1709 = vmatprep.subr.bf16.mxu0 %v1619
      %1710 = vmatpush1.bf16.msra.mxu0 %v1618
      %1711 = vmatprep.subr.bf16.mxu0 %v1623
      %1712 = vmatpush1.bf16.msra.mxu0 %v1622
      %1713 = vmatprep.subr.bf16.mxu0 %v1627
      %1714 = vmatpush1.bf16.msra.mxu0 %v1626
      %1715 = vmatprep.subr.bf16.mxu0 %v1631
      %1716 = vmatpush1.bf16.msra.mxu0 %v1630
      %1717 = vmatprep.subr.bf16.mxu0 %v1635
      %1718 = vmatpush1.bf16.msra.mxu0 %v1634
      %1719 = vmatprep.subr.bf16.mxu0 %v1639
      %1720 = vmatpush1.bf16.msra.mxu0 %v1638
      %1721 = vmatprep.subr.bf16.mxu0 %v1643
      %1722 = vmatpush1.bf16.msra.mxu0 %v1642
      %1723 = vmatprep.subr.bf16.mxu0 %v1647
      %1724 = vmatpush1.bf16.msra.mxu0 %v1646
      %1725 = vmatprep.subr.bf16.mxu0 %v1651
      %1726 = vmatpush1.bf16.msra.mxu0 %v1650
      %1727 = vmatprep.subr.bf16.mxu0 0
      %1728 = vmatpush1.bf16.msra.mxu0 0
      %1729 = vmatprep.subr.bf16.mxu0 0
      %1730 = vmatpush1.bf16.msra.mxu0 0
      %1731 = vmatprep.subr.bf16.mxu0 0
      %1732 = vmatpush1.bf16.msra.mxu0 0
      %1733 = vmatprep.subr.bf16.mxu0 0
      %1734 = vmatpush1.bf16.msra.mxu0 0
      %1735 = vmatprep.subr.bf16.mxu0 0
      %1736 = vmatpush1.bf16.msra.mxu0 0
      %1737 = vmatprep.subr.bf16.mxu0 0
      %1738 = vmatpush1.bf16.msra.mxu0 0
      %1739 = vmatprep.subr.bf16.mxu0 0
      %1740 = vmatpush1.bf16.msra.mxu0 0
      %1741 = vmatprep.mubr.bf16.mxu0 %v1666
      %1742 = vmatmul.mubr.bf16.gmra.mrb[0].mxu0 %v1661
      %v1743 = vpop.f32.mrb[0].mxu0
      %v1744 = vadd.f32 %v1656, %v1743
      %v1745 = vpop.f32.mrb[0].mxu0
      %v1746 = vadd.f32 %v1656, %v1745
      %v1747 = vpop.f32.mrb[0].mxu0
      %v1748 = vpop.f32.mrb[0].mxu0
      %1749 = vdwg.mxu0
      %v1750 = vmax.f32 %v1703, 0.0
      %v1751 = vmax.f32 %v1705, 0.0
      %v1752 = vmax.f32 %v1744, 0.0
      %v1753 = vmax.f32 %v1746, 0.0
      %1754 = vrot.lane.b32.xlu0 %v1750, 17
      %v1755 = vpop.permute.xlu0 %1754
      %1756 = vrot.lane.b32.xlu0 %v1751, 17
      %v1757 = vpop.permute.xlu0 %1756
      %1758 = vrot.lane.b32.xlu0 %v1752, 17
      %v1759 = vpop.permute.xlu0 %1758
      %1760 = vrot.lane.b32.xlu0 %v1753, 17
      %v1761 = vpop.permute.xlu0 %1760
      %v1762 = vsel %vm378, %v1759, %v1761
      %v1763 = vsel %vm378, %v1757, %v1759
      %v1764 = vsel %vm378, %v1755, %v1757
      %v1765 = vsel %vm378, %v1761, %v1755
      %v1766 = vld [vmem:[%s1] sm:$0xff]
      %v1767 = vld [vmem:[%s1 + $0x8] sm:$0xff]
      %v1768 = vld [vmem:[%s1 + $0x10] sm:$0xff]
      %v1769 = vld [vmem:[%s1 + $0x18] sm:$0xff]
      %v1770 = vmul.f32 %v1765, %v1766
      %v1771 = vmul.f32 %v1764, %v1767
      %v1772 = vmul.f32 %v1763, %v1768
      %v1773 = vmul.f32 %v1762, %v1769
      %v1774 = vpack.c.bf16 %v1770, %v1770
      %v1775 = vpack.c.bf16 %v1771, %v1771
      %v1776 = vpack.c.bf16 %v1772, %v1772
      %v1777 = vpack.c.bf16 %v1773, %v1773
      %1778 = vst [vmem:[#allocation2] sm:$0xf] %v1774
      %1779 = vst [vmem:[#allocation2 + $0x8] sm:$0xf] %v1775
      %1780 = vst [vmem:[#allocation2 + $0x10] sm:$0xf] %v1776
      %1781 = vst [vmem:[#allocation2 + $0x18] sm:$0xf] %v1777
      %1782 = vrot.lane.b32.xlu0 %v1750, 16
      %v1783 = vpop.permute.xlu0 %1782
      %1784 = vrot.lane.b32.xlu0 %v1751, 16
      %v1785 = vpop.permute.xlu0 %1784
      %1786 = vrot.lane.b32.xlu0 %v1752, 16
      %v1787 = vpop.permute.xlu0 %1786
      %1788 = vrot.lane.b32.xlu0 %v1753, 16
      %v1789 = vpop.permute.xlu0 %1788
      %v1790 = vsel %vm407, %v1787, %v1789
      %v1791 = vsel %vm407, %v1785, %v1787
      %v1792 = vsel %vm407, %v1783, %v1785
      %v1793 = vsel %vm407, %v1789, %v1783
      %v1794 = vld [vmem:[%s412] sm:$0xff]
      %v1795 = vld [vmem:[%s412 + $0x8] sm:$0xff]
      %v1796 = vld [vmem:[%s412 + $0x10] sm:$0xff]
      %v1797 = vld [vmem:[%s412 + $0x18] sm:$0xff]
      %v1798 = vmul.f32 %v1793, %v1794
      %v1799 = vmul.f32 %v1792, %v1795
      %v1800 = vmul.f32 %v1791, %v1796
      %v1801 = vmul.f32 %v1790, %v1797
      %v1802 = vpack.c.bf16 %v1798, %v1798
      %v1803 = vpack.c.bf16 %v1799, %v1799
      %v1804 = vpack.c.bf16 %v1800, %v1800
      %v1805 = vpack.c.bf16 %v1801, %v1801
      %v1810 = vrot.slane %v1802, 4
      %v1811 = vrot.slane %v1803, 4
      %v1812 = vrot.slane %v1804, 4
      %v1813 = vrot.slane %v1805, 4
      %1818 = vst [vmem:[#allocation2] sm:$0xf0] %v1810
      %1819 = vst [vmem:[#allocation2 + $0x8] sm:$0xf0] %v1811
      %1820 = vst [vmem:[#allocation2 + $0x10] sm:$0xf0] %v1812
      %1821 = vst [vmem:[#allocation2 + $0x18] sm:$0xf0] %v1813
      %1822 = vrot.lane.b32.xlu0 %v1750, 15
      %v1823 = vpop.permute.xlu0 %1822
      %1824 = vrot.lane.b32.xlu0 %v1751, 15
      %v1825 = vpop.permute.xlu0 %1824
      %1826 = vrot.lane.b32.xlu0 %v1752, 15
      %v1827 = vpop.permute.xlu0 %1826
      %1828 = vrot.lane.b32.xlu0 %v1753, 15
      %v1829 = vpop.permute.xlu0 %1828
      %v1830 = vsel %vm449, %v1827, %v1829
      %v1831 = vsel %vm449, %v1825, %v1827
      %v1832 = vsel %vm449, %v1823, %v1825
      %v1833 = vsel %vm449, %v1829, %v1823
      %v1834 = vld [vmem:[%s454] sm:$0xff]
      %v1835 = vld [vmem:[%s454 + $0x8] sm:$0xff]
      %v1836 = vld [vmem:[%s454 + $0x10] sm:$0xff]
      %v1837 = vld [vmem:[%s454 + $0x18] sm:$0xff]
      %v1838 = vmul.f32 %v1833, %v1834
      %v1839 = vmul.f32 %v1832, %v1835
      %v1840 = vmul.f32 %v1831, %v1836
      %v1841 = vmul.f32 %v1830, %v1837
      %v1842 = vpack.c.bf16 %v1838, %v1838
      %v1843 = vpack.c.bf16 %v1839, %v1839
      %v1844 = vpack.c.bf16 %v1840, %v1840
      %v1845 = vpack.c.bf16 %v1841, %v1841
      %1846 = vst [vmem:[#allocation2 + $0x20] sm:$0xf] %v1842
      %1847 = vst [vmem:[#allocation2 + $0x28] sm:$0xf] %v1843
      %1848 = vst [vmem:[#allocation2 + $0x30] sm:$0xf] %v1844
      %1849 = vst [vmem:[#allocation2 + $0x38] sm:$0xf] %v1845
      %1850 = vrot.lane.b32.xlu0 %v1750, 1
      %v1851 = vpop.permute.xlu0 %1850
      %1852 = vrot.lane.b32.xlu0 %v1751, 1
      %v1853 = vpop.permute.xlu0 %1852
      %1854 = vrot.lane.b32.xlu0 %v1752, 1
      %v1855 = vpop.permute.xlu0 %1854
      %1856 = vrot.lane.b32.xlu0 %v1753, 1
      %v1857 = vpop.permute.xlu0 %1856
      %v1858 = vsel %vm479, %v1855, %v1857
      %v1859 = vsel %vm479, %v1853, %v1855
      %v1860 = vsel %vm479, %v1851, %v1853
      %v1861 = vsel %vm479, %v1857, %v1851
      %v1862 = vld [vmem:[%s484] sm:$0xff]
      %v1863 = vld [vmem:[%s484 + $0x8] sm:$0xff]
      %v1864 = vld [vmem:[%s484 + $0x10] sm:$0xff]
      %v1865 = vld [vmem:[%s484 + $0x18] sm:$0xff]
      %v1866 = vmul.f32 %v1861, %v1862
      %v1867 = vmul.f32 %v1860, %v1863
      %v1868 = vmul.f32 %v1859, %v1864
      %v1869 = vmul.f32 %v1858, %v1865
      %v1870 = vpack.c.bf16 %v1866, %v1866
      %v1871 = vpack.c.bf16 %v1867, %v1867
      %v1872 = vpack.c.bf16 %v1868, %v1868
      %v1873 = vpack.c.bf16 %v1869, %v1869
      %v1878 = vrot.slane %v1870, 4
      %v1879 = vrot.slane %v1871, 4
      %v1880 = vrot.slane %v1872, 4
      %v1881 = vrot.slane %v1873, 4
      %1886 = vst [vmem:[#allocation2 + $0x20] sm:$0xf0] %v1878
      %1887 = vst [vmem:[#allocation2 + $0x28] sm:$0xf0] %v1879
      %1888 = vst [vmem:[#allocation2 + $0x30] sm:$0xf0] %v1880
      %1889 = vst [vmem:[#allocation2 + $0x38] sm:$0xf0] %v1881
      %v1890 = vpack.c.bf16 %v1750, %v1750
      %v1891 = vpack.c.bf16 %v1751, %v1751
      %v1892 = vpack.c.bf16 %v1752, %v1752
      %v1893 = vpack.c.bf16 %v1753, %v1753
      %1894 = vst [vmem:[#allocation2 + $0x40] sm:$0xf] %v1890
      %1895 = vst [vmem:[#allocation2 + $0x48] sm:$0xf] %v1891
      %1896 = vst [vmem:[#allocation2 + $0x50] sm:$0xf] %v1892
      %1897 = vst [vmem:[#allocation2 + $0x58] sm:$0xf] %v1893
      %1898 = vrot.lane.b32.xlu0 %v1750, 127
      %v1899 = vpop.permute.xlu0 %1898
      %1900 = vrot.lane.b32.xlu0 %v1751, 127
      %v1901 = vpop.permute.xlu0 %1900
      %1902 = vrot.lane.b32.xlu0 %v1752, 127
      %v1903 = vpop.permute.xlu0 %1902
      %1904 = vrot.lane.b32.xlu0 %v1753, 127
      %v1905 = vpop.permute.xlu0 %1904
      %v1906 = vsel %vm529, %v1903, %v1905
      %v1907 = vsel %vm529, %v1901, %v1903
      %v1908 = vsel %vm529, %v1899, %v1901
      %v1909 = vsel %vm529, %v1905, %v1899
      %v1910 = vld [vmem:[%s534] sm:$0xff]
      %v1911 = vld [vmem:[%s534 + $0x8] sm:$0xff]
      %v1912 = vld [vmem:[%s534 + $0x10] sm:$0xff]
      %v1913 = vld [vmem:[%s534 + $0x18] sm:$0xff]
      %v1914 = vmul.f32 %v1908, %v1910
      %v1915 = vmul.f32 %v1907, %v1911
      %v1916 = vmul.f32 %v1906, %v1912
      %v1917 = vmul.f32 %v1909, %v1913
      %v1918 = vpack.c.bf16 %v1914, %v1914
      %v1919 = vpack.c.bf16 %v1915, %v1915
      %v1920 = vpack.c.bf16 %v1916, %v1916
      %v1921 = vpack.c.bf16 %v1917, %v1917
      %v1926 = vrot.slane %v1918, 4
      %v1927 = vrot.slane %v1919, 4
      %v1928 = vrot.slane %v1920, 4
      %v1929 = vrot.slane %v1921, 4
      %1934 = vst [vmem:[#allocation2 + $0x40] sm:$0xf0] %v1926
      %1935 = vst [vmem:[#allocation2 + $0x48] sm:$0xf0] %v1927
      %1936 = vst [vmem:[#allocation2 + $0x50] sm:$0xf0] %v1928
      %1937 = vst [vmem:[#allocation2 + $0x58] sm:$0xf0] %v1929
      %1938 = vrot.lane.b32.xlu0 %v1750, 113
      %v1939 = vpop.permute.xlu0 %1938
      %1940 = vrot.lane.b32.xlu0 %v1751, 113
      %v1941 = vpop.permute.xlu0 %1940
      %1942 = vrot.lane.b32.xlu0 %v1752, 113
      %v1943 = vpop.permute.xlu0 %1942
      %1944 = vrot.lane.b32.xlu0 %v1753, 113
      %v1945 = vpop.permute.xlu0 %1944
      %v1946 = vsel %vm571, %v1943, %v1945
      %v1947 = vsel %vm571, %v1941, %v1943
      %v1948 = vsel %vm571, %v1939, %v1941
      %v1949 = vsel %vm571, %v1945, %v1939
      %v1950 = vld [vmem:[%s576] sm:$0xff]
      %v1951 = vld [vmem:[%s576 + $0x8] sm:$0xff]
      %v1952 = vld [vmem:[%s576 + $0x10] sm:$0xff]
      %v1953 = vld [vmem:[%s576 + $0x18] sm:$0xff]
      %v1954 = vmul.f32 %v1948, %v1950
      %v1955 = vmul.f32 %v1947, %v1951
      %v1956 = vmul.f32 %v1946, %v1952
      %v1957 = vmul.f32 %v1949, %v1953
      %v1958 = vpack.c.bf16 %v1954, %v1954
      %v1959 = vpack.c.bf16 %v1955, %v1955
      %v1960 = vpack.c.bf16 %v1956, %v1956
      %v1961 = vpack.c.bf16 %v1957, %v1957
      %1962 = vst [vmem:[#allocation2 + $0x60] sm:$0xf] %v1958
      %1963 = vst [vmem:[#allocation2 + $0x68] sm:$0xf] %v1959
      %1964 = vst [vmem:[#allocation2 + $0x70] sm:$0xf] %v1960
      %1965 = vst [vmem:[#allocation2 + $0x78] sm:$0xf] %v1961
      %1966 = vrot.lane.b32.xlu0 %v1750, 112
      %v1967 = vpop.permute.xlu0 %1966
      %1968 = vrot.lane.b32.xlu0 %v1751, 112
      %v1969 = vpop.permute.xlu0 %1968
      %1970 = vrot.lane.b32.xlu0 %v1752, 112
      %v1971 = vpop.permute.xlu0 %1970
      %1972 = vrot.lane.b32.xlu0 %v1753, 112
      %v1973 = vpop.permute.xlu0 %1972
      %v1974 = vsel %vm601, %v1971, %v1973
      %v1975 = vsel %vm601, %v1969, %v1971
      %v1976 = vsel %vm601, %v1967, %v1969
      %v1977 = vsel %vm601, %v1973, %v1967
      %v1978 = vld [vmem:[%s606] sm:$0xff]
      %v1979 = vld [vmem:[%s606 + $0x8] sm:$0xff]
      %v1980 = vld [vmem:[%s606 + $0x10] sm:$0xff]
      %v1981 = vld [vmem:[%s606 + $0x18] sm:$0xff]
      %v1982 = vmul.f32 %v1976, %v1978
      %v1983 = vmul.f32 %v1975, %v1979
      %v1984 = vmul.f32 %v1974, %v1980
      %v1985 = vmul.f32 %v1977, %v1981
      %v1986 = vpack.c.bf16 %v1982, %v1982
      %v1987 = vpack.c.bf16 %v1983, %v1983
      %v1988 = vpack.c.bf16 %v1984, %v1984
      %v1989 = vpack.c.bf16 %v1985, %v1985
      %v1994 = vrot.slane %v1986, 4
      %v1995 = vrot.slane %v1987, 4
      %v1996 = vrot.slane %v1988, 4
      %v1997 = vrot.slane %v1989, 4
      %2002 = vst [vmem:[#allocation2 + $0x60] sm:$0xf0] %v1994
      %2003 = vst [vmem:[#allocation2 + $0x68] sm:$0xf0] %v1995
      %2004 = vst [vmem:[#allocation2 + $0x70] sm:$0xf0] %v1996
      %2005 = vst [vmem:[#allocation2 + $0x78] sm:$0xf0] %v1997
      %2006 = vrot.lane.b32.xlu0 %v1750, 111
      %v2007 = vpop.permute.xlu0 %2006
      %2008 = vrot.lane.b32.xlu0 %v1751, 111
      %v2009 = vpop.permute.xlu0 %2008
      %2010 = vrot.lane.b32.xlu0 %v1752, 111
      %v2011 = vpop.permute.xlu0 %2010
      %2012 = vrot.lane.b32.xlu0 %v1753, 111
      %v2013 = vpop.permute.xlu0 %2012
      %v2014 = vsel %vm643, %v2011, %v2013
      %v2015 = vsel %vm643, %v2009, %v2011
      %v2016 = vsel %vm643, %v2007, %v2009
      %v2017 = vsel %vm643, %v2013, %v2007
      %v2018 = vld [vmem:[%s648] sm:$0xff]
      %v2019 = vld [vmem:[%s648 + $0x8] sm:$0xff]
      %v2020 = vld [vmem:[%s648 + $0x10] sm:$0xff]
      %v2021 = vld [vmem:[%s648 + $0x18] sm:$0xff]
      %v2022 = vmul.f32 %v2016, %v2018
      %v2023 = vmul.f32 %v2015, %v2019
      %v2024 = vmul.f32 %v2014, %v2020
      %v2025 = vmul.f32 %v2017, %v2021
      %v2026 = vpack.c.bf16 %v2022, %v2022
      %v2027 = vpack.c.bf16 %v2023, %v2023
      %v2028 = vpack.c.bf16 %v2024, %v2024
      %v2029 = vpack.c.bf16 %v2025, %v2025
      %2030 = vst [vmem:[#allocation2 + $0x80] sm:$0xf] %v2026
      %2031 = vst [vmem:[#allocation2 + $0x88] sm:$0xf] %v2027
      %2032 = vst [vmem:[#allocation2 + $0x90] sm:$0xf] %v2028
      %2033 = vst [vmem:[#allocation2 + $0x98] sm:$0xf] %v2029
      %v2034 = vld [vmem:[%s8] sm:$0xf]
      %v2035 = vld [vmem:[#allocation2] sm:$0xff]
      %v2036 = vld [vmem:[#allocation2 + $0x8] sm:$0xff]
      %v2037 = vld [vmem:[#allocation2 + $0x10] sm:$0xff]
      %v2038 = vld [vmem:[#allocation2 + $0x18] sm:$0xff]
      %v2039 = vld [vmem:[#allocation2 + $0x20] sm:$0xff]
      %v2040 = vld [vmem:[#allocation2 + $0x28] sm:$0xff]
      %v2041 = vld [vmem:[#allocation2 + $0x30] sm:$0xff]
      %v2042 = vld [vmem:[#allocation2 + $0x38] sm:$0xff]
      %v2043 = vld [vmem:[#allocation2 + $0x40] sm:$0xff]
      %v2044 = vld [vmem:[#allocation2 + $0x48] sm:$0xff]
      %v2045 = vld [vmem:[#allocation2 + $0x50] sm:$0xff]
      %v2046 = vld [vmem:[#allocation2 + $0x58] sm:$0xff]
      %v2047 = vld [vmem:[#allocation2 + $0x60] sm:$0xff]
      %v2048 = vld [vmem:[#allocation2 + $0x68] sm:$0xff]
      %v2049 = vld [vmem:[#allocation2 + $0x70] sm:$0xff]
      %v2050 = vld [vmem:[#allocation2 + $0x78] sm:$0xff]
      %v2051 = vld [vmem:[#allocation2 + $0x80] sm:$0xf]
      %v2052 = vld [vmem:[#allocation2 + $0x88] sm:$0xf]
      %v2053 = vld [vmem:[#allocation2 + $0x90] sm:$0xf]
      %v2054 = vld [vmem:[#allocation2 + $0x98] sm:$0xf]
      %v2055 = vld [vmem:[%s9] sm:$0xff]
      %2057 = vset.pattern.permute.xlu0 0
      %2058 = vperm.xlu0 %2057, %v2055
      %v2059 = vpop.permute.xlu0 %2058
      %v2062 = vsel %vm692, %v2034, 0
      %v2065 = vsel %vm696, %v2051, 0
      %v2068 = vsel %vm696, %v2052, 0
      %v2071 = vsel %vm696, %v2053, 0
      %v2074 = vsel %vm696, %v2054, 0
      %2076 = vmatprep.subr.bf16.mxu0 %v2036
      %2077 = vmatpush1.bf16.msra.mxu0 %v2035
      %2078 = vmatprep.subr.bf16.mxu0 %v2040
      %2079 = vmatpush1.bf16.msra.mxu0 %v2039
      %2080 = vmatprep.subr.bf16.mxu0 %v2044
      %2081 = vmatpush1.bf16.msra.mxu0 %v2043
      %2082 = vmatprep.subr.bf16.mxu0 %v2048
      %2083 = vmatpush1.bf16.msra.mxu0 %v2047
      %2084 = vmatprep.subr.bf16.mxu0 %v2068
      %2085 = vmatpush1.bf16.msra.mxu0 %v2065
      %2086 = vmatprep.subr.bf16.mxu0 0
      %2087 = vmatpush1.bf16.msra.mxu0 0
      %2088 = vmatprep.subr.bf16.mxu0 0
      %2089 = vmatpush1.bf16.msra.mxu0 0
      %2090 = vmatprep.subr.bf16.mxu0 0
      %2091 = vmatpush1.bf16.msra.mxu0 0
      %2092 = vmatprep.subr.bf16.mxu0 0
      %2093 = vmatpush1.bf16.msra.mxu0 0
      %2094 = vmatprep.subr.bf16.mxu0 0
      %2095 = vmatpush1.bf16.msra.mxu0 0
      %2096 = vmatprep.subr.bf16.mxu0 0
      %2097 = vmatpush1.bf16.msra.mxu0 0
      %2098 = vmatprep.subr.bf16.mxu0 0
      %2099 = vmatpush1.bf16.msra.mxu0 0
      %2100 = vmatprep.subr.bf16.mxu0 0
      %2101 = vmatpush1.bf16.msra.mxu0 0
      %2102 = vmatprep.subr.bf16.mxu0 0
      %2103 = vmatpush1.bf16.msra.mxu0 0
      %2104 = vmatprep.subr.bf16.mxu0 0
      %2105 = vmatpush1.bf16.msra.mxu0 0
      %2106 = vmatprep.subr.bf16.mxu0 0
      %2107 = vmatpush1.bf16.msra.mxu0 0
      %2108 = vmatprep.mubr.bf16.mxu0 0
      %2109 = vmatmul.mubr.bf16.gmra.mrb[0].mxu0 %v2062
      %v2110 = vpop.f32.mrb[0].mxu0
      %v2111 = vadd.f32 %v2059, %v2110
      %v2112 = vpop.f32.mrb[0].mxu0
      %v2113 = vadd.f32 %v2059, %v2112
      %v2114 = vpop.f32.mrb[0].mxu0
      %v2115 = vpop.f32.mrb[0].mxu0
      %2116 = vdwg.mxu0
      %2117 = vmatprep.subr.bf16.mxu0 %v2038
      %2118 = vmatpush1.bf16.msra.mxu0 %v2037
      %2119 = vmatprep.subr.bf16.mxu0 %v2042
      %2120 = vmatpush1.bf16.msra.mxu0 %v2041
      %2121 = vmatprep.subr.bf16.mxu0 %v2046
      %2122 = vmatpush1.bf16.msra.mxu0 %v2045
      %2123 = vmatprep.subr.bf16.mxu0 %v2050
      %2124 = vmatpush1.bf16.msra.mxu0 %v2049
      %2125 = vmatprep.subr.bf16.mxu0 %v2074
      %2126 = vmatpush1.bf16.msra.mxu0 %v2071
      %2127 = vmatprep.subr.bf16.mxu0 0
      %2128 = vmatpush1.bf16.msra.mxu0 0
      %2129 = vmatprep.subr.bf16.mxu0 0
      %2130 = vmatpush1.bf16.msra.mxu0 0
      %2131 = vmatprep.subr.bf16.mxu0 0
      %2132 = vmatpush1.bf16.msra.mxu0 0
      %2133 = vmatprep.subr.bf16.mxu0 0
      %2134 = vmatpush1.bf16.msra.mxu0 0
      %2135 = vmatprep.subr.bf16.mxu0 0
      %2136 = vmatpush1.bf16.msra.mxu0 0
      %2137 = vmatprep.subr.bf16.mxu0 0
      %2138 = vmatpush1.bf16.msra.mxu0 0
      %2139 = vmatprep.subr.bf16.mxu0 0
      %2140 = vmatpush1.bf16.msra.mxu0 0
      %2141 = vmatprep.subr.bf16.mxu0 0
      %2142 = vmatpush1.bf16.msra.mxu0 0
      %2143 = vmatprep.subr.bf16.mxu0 0
      %2144 = vmatpush1.bf16.msra.mxu0 0
      %2145 = vmatprep.subr.bf16.mxu0 0
      %2146 = vmatpush1.bf16.msra.mxu0 0
      %2147 = vmatprep.subr.bf16.mxu0 0
      %2148 = vmatpush1.bf16.msra.mxu0 0
      %2149 = vmatprep.mubr.bf16.mxu0 0
      %2150 = vmatmul.mubr.bf16.gmra.mrb[0].mxu0 %v2062
      %v2151 = vpop.f32.mrb[0].mxu0
      %v2152 = vadd.f32 %v2059, %v2151
      %v2153 = vpop.f32.mrb[0].mxu0
      %v2154 = vadd.f32 %v2059, %v2153
      %v2155 = vpop.f32.mrb[0].mxu0
      %v2156 = vpop.f32.mrb[0].mxu0
      %2157 = vdwg.mxu0
      %2158 = vst [vmem:[%s361] sm:$0xff] %v2111
      %2159 = vst [vmem:[%s361 + $0x8] sm:$0xff] %v2113
      %2160 = vst [vmem:[%s361 + $0x10] sm:$0xff] %v2152
      %2161 = vst [vmem:[%s361 + $0x18] sm:$0xff] %v2154
      %s2162 = smul.u32 4, %s21
      %p2163 = scmp.lt.s32.totalorder %s2162, 7
      %s2164 = scalar_select %p2163, %s2162, 7
      %s2165 = smul.addr %s2164, 8
      %s2166 = scalar_lea.vmem %s10, %s2165
      // Predicated region
      $region61: #{combinatorial_forward.1} parent=59 // pred_check
        %p2167 = pneg %p254
      $region62: #{combinatorial_forward.1} parent=59 // pred_check_branch
        %2169 = sbr.rel (%p2167) target = $region64
      $region63: #{combinatorial_forward.1} parent=59 // pred_region
        %s2170 = smul.u32 4, %s21
      $region64: #{combinatorial_forward.1} parent=59 // pred_fallthru
        _
    $region60: #{combinatorial_forward.1} parent=5 // pred_fallthru
      _
    %p2171 = scmp.le.s32.totalorder 2, %s16
    // Predicated region
    $region65: #{combinatorial_forward.1} parent=5 // pred_check
      %p2172 = pneg %p2171
    $region66: #{combinatorial_forward.1} parent=5 // pred_check_branch
      %2174 = sbr.rel (%p2172) target = $region68
    $region67: #{combinatorial_forward.1} parent=5 // pred_region
      %s2175 = ssub.s32 %s16, 2
      // Predicated region
      $region69: #{combinatorial_forward.1} parent=67 // pred_check
        %p2176 = pneg %p260
      $region70: #{combinatorial_forward.1} parent=67 // pred_check_branch
        %2178 = sbr.rel (%p2176) target = $region72
      $region71: #{combinatorial_forward.1} parent=67 // pred_region
        %s2179 = smul.u32 4, %s22
        %p2180 = scmp.lt.s32.totalorder %s2179, 7
        %s2181 = scalar_select %p2180, %s2179, 7
        %s2182 = smul.addr %s2181, 8
        %s2183 = scalar_lea.vmem %s10, %s2182
      $region72: #{combinatorial_forward.1} parent=67 // pred_fallthru
        _
    $region68: #{combinatorial_forward.1} parent=5 // pred_fallthru
      _
  $region6: #{combinatorial_forward.1} parent=0 // loop_footer
    %s20 = sadd.s32 1, %s16
  $region7: #{combinatorial_forward.1} parent=0 // loop_footer_branch
    %15 = sbr.rel target = $region3
  $region8: #{combinatorial_forward.1} parent=0 // loop_exit
    _

</llo_original>
